<compile_context>
chip_gen: v5e
topology: v5e:2x2
jax: 0.10.0
libtpu: 0.0.40
codegen_flags: <defaults>
</compile_context>

<pallas_src>
from functools import partial

import jax
import jax.numpy as jnp
from jax.experimental import pallas as pl
from jax.experimental.pallas import tpu as pltpu

EXPANSION = 4


# ---------------------------------------------------------------------------
# Fused Bottleneck kernel (one grid step = one batch element x one row tile)
# ---------------------------------------------------------------------------
def _bottleneck_kernel(*refs, H, W, Cin, planes, Cexp, Wo, TH, stride,
                       has_proj, bottom_pad, cdt):
    if has_proj:
        (x_ref, w1_ref, s1_ref, b1_ref, w2_ref, s2_ref, b2_ref,
         w3_ref, s3_ref, b3_ref, ws_ref, ss_ref, bs_ref,
         o_ref, o1p_ref, pat_ref) = refs
    else:
        (x_ref, w1_ref, s1_ref, b1_ref, w2_ref, s2_ref, b2_ref,
         w3_ref, s3_ref, b3_ref, o_ref, o1p_ref, pat_ref) = refs
        ws_ref = ss_ref = bs_ref = None

    r = pl.program_id(1)
    rwin = (TH - 1) * stride + 3          # conv1 rows needed by this tile (incl. halo)
    Wp = W + 2                            # 1-px zero pad on each side (conv2 pad=1)
    base = r * TH * stride - 1            # input row held by scratch row 0 (may be -1)

    def conv1(x2d):                       # (M, Cin) -> (M, planes) bf16, bn+relu folded
        acc = jnp.dot(x2d.astype(cdt), w1_ref[...],
                      preferred_element_type=jnp.float32)
        return jnp.maximum(acc * s1_ref[...] + b1_ref[...], 0.0).astype(cdt)

    # ---- conv1 + bn1 + relu for this tile's halo window -> small bf16 scratch.
    # Zero only the 1-px left/right padding columns (border strips).
    zcol = jnp.zeros((rwin, 1, planes), cdt)
    o1p_ref[:, 0:1, :] = zcol
    o1p_ref[:, W + 1:W + 2, :] = zcol

    # Interior window rows are always fully inside the image.
    xm = x_ref[:, pl.ds(base + 1, rwin - 2), :, :]            # (1, rwin-2, W, Cin)
    o1p_ref[1:rwin - 1, 1:W + 1, :] = conv1(
        xm.reshape((rwin - 2) * W, Cin)).reshape(rwin - 2, W, planes)

    # Top halo row: real data except on the first tile (zero padding).
    xt = x_ref[:, pl.ds(jnp.maximum(base, 0), 1), :, :]
    o1p_ref[0:1, 1:W + 1, :] = conv1(xt.reshape(W, Cin)).reshape(1, W, planes)

    @pl.when(r == 0)
    def _zero_top():
        o1p_ref[0:1, :, :] = jnp.zeros((1, Wp, planes), cdt)

    # Bottom halo row: real data except (possibly) on the last tile.
    last_in = base + rwin - 1
    xb = x_ref[:, pl.ds(jnp.minimum(last_in, H - 1), 1), :, :]
    o1p_ref[rwin - 1:rwin, 1:W + 1, :] = conv1(xb.reshape(W, Cin)).reshape(1, W, planes)
    if bottom_pad:
        @pl.when(last_in >= H)
        def _zero_bottom():
            o1p_ref[rwin - 1:rwin, :, :] = jnp.zeros((1, Wp, planes), cdt)

    # ---- conv2 (3x3, stride, pad=1) + bn2 + relu as ONE im2col matmul.
    if stride == 1:
        for k in range(9):
            ky, kx = divmod(k, 3)
            tap = o1p_ref[ky:ky + TH, kx:kx + Wo, :]           # contiguous ref slice
            pat_ref[:, k * planes:(k + 1) * planes] = tap.reshape(TH * Wo, planes)
    else:
        # Hoist the stride-2 column subsample: split the window into col-parity
        # planes once; every tap then takes a contiguous column slice.
        win = o1p_ref[...]                                     # (rwin, Wp, planes) bf16
        even = jax.lax.slice(win, (0, 0, 0), (rwin, 2 * Wo + 1, planes), (1, 2, 1))
        odd = jax.lax.slice(win, (0, 1, 0), (rwin, 2 * Wo, planes), (1, 2, 1))
        for k in range(9):
            ky, kx = divmod(k, 3)
            src = even if kx % 2 == 0 else odd
            jx = kx // 2
            tap = jax.lax.slice(src, (ky, jx, 0),
                                (ky + stride * (TH - 1) + 1, jx + Wo, planes),
                                (stride, 1, 1))                # (TH, Wo, planes)
            pat_ref[:, k * planes:(k + 1) * planes] = tap.reshape(TH * Wo, planes)

    a2 = jnp.dot(pat_ref[...], w2_ref[...], preferred_element_type=jnp.float32)
    o2 = jnp.maximum(a2 * s2_ref[...] + b2_ref[...], 0.0)      # (TH*Wo, planes) f32

    # ---- conv3 (1x1) + bn3.
    y = jnp.dot(o2.astype(cdt), w3_ref[...], preferred_element_type=jnp.float32)
    y = y * s3_ref[...] + b3_ref[...]                          # (TH*Wo, Cexp) f32

    # ---- shortcut straight from the resident x block (no HBM round trip).
    if has_proj:
        rs = (TH - 1) * stride + 1
        xw = x_ref[:, pl.ds(base + 1, rs), :, :][0]            # (rs, W, Cin)
        xs = jax.lax.slice(xw, (0, 0, 0),
                           ((TH - 1) * stride + 1, (Wo - 1) * stride + 1, Cin),
                           (stride, stride, 1))                # (TH, Wo, Cin)
        sc = jnp.dot(xs.reshape(TH * Wo, Cin).astype(cdt), ws_ref[...],
                     preferred_element_type=jnp.float32)
        sc = sc * ss_ref[...] + bs_ref[...]
    else:
        sc = x_ref[:, pl.ds(r * TH, TH), :, :].reshape(TH * Wo, Cexp)
        sc = sc.astype(jnp.float32)

    # ---- residual add + final relu; single fused store.
    o_ref[...] = jnp.maximum(y + sc, 0.0).reshape(1, TH, Wo, Cexp).astype(o_ref.dtype)


# ---------------------------------------------------------------------------
# Wrappers
# ---------------------------------------------------------------------------
def bottleneck_forward_nhwc(x, params, *, stride=1, row_tile=None,
                            compute_dtype=jnp.bfloat16):
    """Fused Bottleneck forward, NHWC in / NHWC out (output dtype = x dtype)."""
    N, H, W, Cin = x.shape
    planes = params["w1"].shape[1]
    Cexp = params["w3"].shape[1]
    Ho = (H - 1) // stride + 1
    Wo = (W - 1) // stride + 1
    has_proj = (stride != 1) or (Cin != Cexp)

    if row_tile is None:
        # Whole feature map for small late-stage maps; 8/16-row tiles for the
        # 56x56 stage (re-derive for v7x's 64 MiB VMEM if blocks get large).
        if Ho <= 32:
            row_tile = Ho
        else:
            row_tile = next((t for t in (16, 8, 4, 2) if Ho % t == 0), Ho)
    TH = row_tile
    assert Ho % TH == 0, (Ho, TH)
    r_tiles = Ho // TH

    rwin = (TH - 1) * stride + 3
    Wp = W + 2
    bottom_pad = ((Ho - 1) * stride + 1) >= H   # last tile's bottom halo row is padding

    cdt = compute_dtype
    # Pre-cast weights to the compute dtype and pre-reshape w2 for im2col
    # (no per-grid-step casts, half the weight DMA / VMEM residency).
    w1 = params["w1"].astype(cdt)
    w2i = params["w2"].reshape(9 * planes, planes).astype(cdt)
    w3 = params["w3"].astype(cdt)

    args = [x, w1, params["s1"], params["b1"],
            w2i, params["s2"], params["b2"],
            w3, params["s3"], params["b3"]]
    in_specs = [
        # x stays resident in VMEM across the row-tile axis (index ignores r).
        pl.BlockSpec((1, H, W, Cin), lambda n, r: (n, 0, 0, 0)),
        pl.BlockSpec((Cin, planes), lambda n, r: (0, 0)),
        pl.BlockSpec((1, planes), lambda n, r: (0, 0)),
        pl.BlockSpec((1, planes), lambda n, r: (0, 0)),
        pl.BlockSpec((9 * planes, planes), lambda n, r: (0, 0)),
        pl.BlockSpec((1, planes), lambda n, r: (0, 0)),
        pl.BlockSpec((1, planes), lambda n, r: (0, 0)),
        pl.BlockSpec((planes, Cexp), lambda n, r: (0, 0)),
        pl.BlockSpec((1, Cexp), lambda n, r: (0, 0)),
        pl.BlockSpec((1, Cexp), lambda n, r: (0, 0)),
    ]
    if has_proj:
        args += [params["ws"].astype(cdt), params["ss"], params["bs"]]
        in_specs += [
            pl.BlockSpec((Cin, Cexp), lambda n, r: (0, 0)),
            pl.BlockSpec((1, Cexp), lambda n, r: (0, 0)),
            pl.BlockSpec((1, Cexp), lambda n, r: (0, 0)),
        ]

    kernel = partial(_bottleneck_kernel, H=H, W=W, Cin=Cin, planes=planes,
                     Cexp=Cexp, Wo=Wo, TH=TH, stride=stride,
                     has_proj=has_proj, bottom_pad=bottom_pad, cdt=cdt)

    # Explicit VMEM budget: double-buffered x / out blocks + weights + both
    # scratches + f32 temporaries, with 2x headroom (capped for v7x's 64 MiB).
    act_b = jnp.dtype(x.dtype).itemsize
    cdt_b = jnp.dtype(cdt).itemsize
    x_blk = H * W * Cin * act_b
    out_blk = TH * Wo * Cexp * act_b
    w_bytes = sum(int(a.size) * jnp.dtype(a.dtype).itemsize for a in args[1:])
    scratch_b = (rwin * Wp * planes + TH * Wo * 9 * planes) * cdt_b
    tmp_b = TH * Wo * (9 * planes + planes + 2 * Cexp) * 4
    est = 2 * (x_blk + out_blk + w_bytes) + scratch_b + tmp_b
    vmem_limit = int(min(max(2 * est, 8 << 20), 64 << 20))

    return pl.pallas_call(
        kernel,
        out_shape=jax.ShapeDtypeStruct((N, Ho, Wo, Cexp), x.dtype),
        grid=(N, r_tiles),
        in_specs=in_specs,
        out_specs=pl.BlockSpec((1, TH, Wo, Cexp), lambda n, r: (n, r, 0, 0)),
        scratch_shapes=[pltpu.VMEM((rwin, Wp, planes), cdt),      # conv1 halo window
                        pltpu.VMEM((TH * Wo, 9 * planes), cdt)],  # im2col patches
        compiler_params=pltpu.CompilerParams(
            # No cross-iteration carry anymore -> both axes parallel (megacore
            # gets work even at batch=1 on v7x).
            dimension_semantics=("parallel", "parallel"),
            vmem_limit_bytes=vmem_limit),
    )(*args)


def bottleneck_forward(x_nchw, params, *, stride=1, **kw):
    """PyTorch-layout (NCHW) convenience wrapper.

    In a full network keep activations NHWC (ideally bf16) end-to-end and call
    `bottleneck_forward_nhwc` directly (transposes here are demo-only overhead).
    """
    x = jnp.transpose(x_nchw, (0, 2, 3, 1))
    y = bottleneck_forward_nhwc(x, params, stride=stride, **kw)
    return jnp.transpose(y, (0, 3, 1, 2))


# ---------------------------------------------------------------------------
# Deterministic parameter init + references
# ---------------------------------------------------------------------------
def _fold_bn(gamma, beta, mean, var, eps=1e-5):
    scale = gamma / jnp.sqrt(var + eps)
    bias = beta - mean * scale
    return scale[None, :], bias[None, :]


def make_params(key, in_planes, planes, stride):
    exp_planes = EXPANSION * planes
    ks = jax.random.split(key, 16)

    def bn(k, c):
        k1, k2, k3, k4 = jax.random.split(k, 4)
        gamma = jax.random.uniform(k1, (c,), jnp.float32, 0.5, 1.5)
        beta = jax.random.normal(k2, (c,), jnp.float32) * 0.1
        mean = jax.random.normal(k3, (c,), jnp.float32) * 0.1
        var = jax.random.uniform(k4, (c,), jnp.float32, 0.5, 1.5)
        return _fold_bn(gamma, beta, mean, var)

    p = {}
    p["w1"] = jax.random.normal(ks[0], (in_planes, planes), jnp.float32) * 0.2
    p["s1"], p["b1"] = bn(ks[1], planes)
    p["w2"] = jax.random.normal(ks[2], (9, planes, planes), jnp.float32) * 0.2
    p["s2"], p["b2"] = bn(ks[3], planes)
    p["w3"] = jax.random.normal(ks[4], (planes, exp_planes), jnp.float32) * 0.2
    p["s3"], p["b3"] = bn(ks[5], exp_planes)
    if stride != 1 or in_planes != exp_planes:
        p["ws"] = jax.random.normal(ks[6], (in_planes, exp_planes), jnp.float32) * 0.2
        p["ss"], p["bs"] = bn(ks[7], exp_planes)
    return p


def bottleneck_reference_f32(x, params, *, stride=1):
    """Pure f32 JAX reference mirroring the PyTorch module (eval-mode BN). NHWC."""
    N, H, W, Cin = x.shape
    planes = params["w1"].shape[1]
    Cexp = params["w3"].shape[1]
    o = jnp.einsum("nhwc,cd->nhwd", x, params["w1"]) * params["s1"][0] + params["b1"][0]
    o = jnp.maximum(o, 0.0)
    w2 = params["w2"].reshape(3, 3, planes, planes)
    o = jax.lax.conv_general_dilated(o, w2, (stride, stride), ((1, 1), (1, 1)),
                                     dimension_numbers=("NHWC", "HWIO", "NHWC"))
    o = jnp.maximum(o * params["s2"][0] + params["b2"][0], 0.0)
    o = jnp.einsum("nhwc,cd->nhwd", o, params["w3"]) * params["s3"][0] + params["b3"][0]
    if stride != 1 or Cin != Cexp:
        xs = x[:, ::stride, ::stride, :]
        sc = (jnp.einsum("nhwc,cd->nhwd", xs, params["ws"]) * params["ss"][0]
              + params["bs"][0])
    else:
        sc = x
    return jnp.maximum(o + sc, 0.0)


def bottleneck_reference_quant(x, params, *, stride=1, cdt=jnp.bfloat16):
    """Reference mirroring the kernel's bf16-operand / f32-accumulate MXU math."""
    N, H, W, Cin = x.shape
    planes = params["w1"].shape[1]
    Cexp = params["w3"].shape[1]

    def dot(a, b):
        return jnp.dot(a.astype(cdt), b.astype(cdt),
                       preferred_element_type=jnp.float32)

    o1 = dot(x.reshape(-1, Cin), params["w1"]) * params["s1"] + params["b1"]
    o1 = jnp.maximum(o1, 0.0).reshape(N, H, W, planes)
    w2 = params["w2"].reshape(3, 3, planes, planes)
    o2 = jax.lax.conv_general_dilated(
        o1.astype(cdt), w2.astype(cdt), (stride, stride), ((1, 1), (1, 1)),
        dimension_numbers=("NHWC", "HWIO", "NHWC"),
        preferred_element_type=jnp.float32)
    o2 = jnp.maximum(o2 * params["s2"][0] + params["b2"][0], 0.0)
    Ho, Wo = o2.shape[1], o2.shape[2]
    y = dot(o2.reshape(-1, planes), params["w3"]) * params["s3"] + params["b3"]
    if stride != 1 or Cin != Cexp:
        xs = x[:, ::stride, ::stride, :]
        sc = dot(xs.reshape(-1, Cin), params["ws"]) * params["ss"] + params["bs"]
    else:
        sc = x.reshape(-1, Cexp)
    return jnp.maximum(y + sc, 0.0).reshape(N, Ho, Wo, Cexp)


# ---------------------------------------------------------------------------
if __name__ == "__main__":
    key = jax.random.PRNGKey(0)

    configs = [
        # (N, Cin, H, W, planes, stride, row_tile)
        (2, 4, 16, 16, 4, 1, 4),      # projection shortcut, 4 row tiles (top+bottom halo pad)
        (2, 8, 16, 16, 4, 2, 4),      # strided projection shortcut, 2 row tiles
        (2, 16, 16, 16, 4, 1, None),  # identity shortcut, whole-map single tile
    ]
    for i, (N, Cin, H, W, planes, stride, row_tile) in enumerate(configs):
        k_x, k_p = jax.random.split(jax.random.fold_in(key, i))
        x_nchw = jax.random.normal(k_x, (N, Cin, H, W), jnp.float32)
        params = make_params(k_p, Cin, planes, stride)

        # bf16 activations end-to-end in the hot path (halves HBM traffic on v5e).
        x = jnp.transpose(x_nchw, (0, 2, 3, 1)).astype(jnp.bfloat16)
        out = jax.block_until_ready(
            bottleneck_forward_nhwc(x, params, stride=stride, row_tile=row_tile))

        Ho = (H - 1) // stride + 1
        assert out.shape == (N, Ho, Ho, EXPANSION * planes), out.shape
        assert out.dtype == x.dtype

        xf = x.astype(jnp.float32)     # same (bf16-rounded) input for both references
        out_f = out.astype(jnp.float32)
        ref_q = bottleneck_reference_quant(xf, params, stride=stride)
        ref_f = bottleneck_reference_f32(xf, params, stride=stride)
        # Tight check vs. a reference with identical bf16-operand math.
        assert jnp.allclose(out_f, ref_q, atol=5e-2, rtol=5e-2), \
            float(jnp.max(jnp.abs(out_f - ref_q)))
        # Looser check vs. the pure-f32 PyTorch-equivalent reference.
        assert jnp.allclose(out_f, ref_f, atol=1.5e-1, rtol=1e-1), \
            float(jnp.max(jnp.abs(out_f - ref_f)))

    # Exercise the PyTorch-layout wrapper (f32 activations) at [2, 4, 16, 16].
    N, Cin, H, W, planes, stride, _ = configs[0]
    k_x, k_p = jax.random.split(jax.random.fold_in(key, 0))
    x_nchw = jax.random.normal(k_x, (N, Cin, H, W), jnp.float32)
    params = make_params(k_p, Cin, planes, stride)
    out_nchw = jax.block_until_ready(bottleneck_forward(x_nchw, params, stride=stride))
    assert out_nchw.shape == (N, EXPANSION * planes, H, W), out_nchw.shape
    ref = bottleneck_reference_quant(jnp.transpose(x_nchw, (0, 2, 3, 1)),
                                     params, stride=stride)
    assert jnp.allclose(jnp.transpose(out_nchw, (0, 2, 3, 1)), ref,
                        atol=2e-2, rtol=2e-2)

    print("KERNEL_OK")
</pallas_src>

<mosaic_0001>
module attributes {stable_mosaic.version = 11 : i64} {
  func.func @_bottleneck_kernel(%arg0: i32, %arg1: i32, %arg2: memref<1x16x16x4xbf16, #tpu.memory_space<vmem>>, %arg3: memref<4x4xbf16, #tpu.memory_space<vmem>>, %arg4: memref<1x4xf32, #tpu.memory_space<vmem>>, %arg5: memref<1x4xf32, #tpu.memory_space<vmem>>, %arg6: memref<36x4xbf16, #tpu.memory_space<vmem>>, %arg7: memref<1x4xf32, #tpu.memory_space<vmem>>, %arg8: memref<1x4xf32, #tpu.memory_space<vmem>>, %arg9: memref<4x16xbf16, #tpu.memory_space<vmem>>, %arg10: memref<1x16xf32, #tpu.memory_space<vmem>>, %arg11: memref<1x16xf32, #tpu.memory_space<vmem>>, %arg12: memref<4x16xbf16, #tpu.memory_space<vmem>>, %arg13: memref<1x16xf32, #tpu.memory_space<vmem>>, %arg14: memref<1x16xf32, #tpu.memory_space<vmem>>, %arg15: memref<1x4x16x16xbf16, #tpu.memory_space<vmem>>, %arg16: memref<6x18x4xbf16, #tpu.memory_space<vmem>>, %arg17: memref<64x36xbf16, #tpu.memory_space<vmem>>) attributes {dimension_semantics = [#tpu.dimension_semantics<parallel>, #tpu.dimension_semantics<parallel>], iteration_bounds = array<i64: 2, 4>, scalar_prefetch = 0 : i64, scratch_operands = 2 : i64, tpu.core_type = #tpu.core_type<tc>, window_params = [{transform_indices = @transform_0, window_bounds = array<i64: 1, 16, 16, 4>}, {pipeline_mode = #tpu.pipeline_mode<synchronous>, transform_indices = @transform_1, window_bounds = array<i64: 4, 4>}, {pipeline_mode = #tpu.pipeline_mode<synchronous>, transform_indices = @transform_2, window_bounds = array<i64: 1, 4>}, {pipeline_mode = #tpu.pipeline_mode<synchronous>, transform_indices = @transform_3, window_bounds = array<i64: 1, 4>}, {pipeline_mode = #tpu.pipeline_mode<synchronous>, transform_indices = @transform_4, window_bounds = array<i64: 36, 4>}, {pipeline_mode = #tpu.pipeline_mode<synchronous>, transform_indices = @transform_5, window_bounds = array<i64: 1, 4>}, {pipeline_mode = #tpu.pipeline_mode<synchronous>, transform_indices = @transform_6, window_bounds = array<i64: 1, 4>}, {pipeline_mode = #tpu.pipeline_mode<synchronous>, transform_indices = @transform_7, window_bounds = array<i64: 4, 16>}, {pipeline_mode = #tpu.pipeline_mode<synchronous>, transform_indices = @transform_8, window_bounds = array<i64: 1, 16>}, {pipeline_mode = #tpu.pipeline_mode<synchronous>, transform_indices = @transform_9, window_bounds = array<i64: 1, 16>}, {pipeline_mode = #tpu.pipeline_mode<synchronous>, transform_indices = @transform_10, window_bounds = array<i64: 4, 16>}, {pipeline_mode = #tpu.pipeline_mode<synchronous>, transform_indices = @transform_11, window_bounds = array<i64: 1, 16>}, {pipeline_mode = #tpu.pipeline_mode<synchronous>, transform_indices = @transform_12, window_bounds = array<i64: 1, 16>}, {transform_indices = @transform_13, window_bounds = array<i64: 1, 4, 16, 16>}]} {
    %c4_i32 = arith.constant 4 : i32
    %0 = arith.muli %arg1, %c4_i32 : i32
    %c1_i32 = arith.constant 1 : i32
    %1 = arith.muli %0, %c1_i32 : i32
    %c1_i32_0 = arith.constant 1 : i32
    %2 = arith.subi %1, %c1_i32_0 : i32
    %cst = arith.constant 0.000000e+00 : bf16
    %3 = vector.broadcast %cst : bf16 to vector<6x1x4xbf16>
    %c0 = arith.constant 0 : index
    %c0_1 = arith.constant 0 : index
    %c0_2 = arith.constant 0 : index
    %4 = vector.load %arg16[%c0, %c0_1, %c0_2] : memref<6x18x4xbf16, #tpu.memory_space<vmem>>, vector<6x1x4xbf16>
    tpu.vector_store %arg16[%c0, %c0_1, %c0_2], %3 {strides = array<i32>} : memref<6x18x4xbf16, #tpu.memory_space<vmem>>, vector<6x1x4xbf16>,
    %c0_3 = arith.constant 0 : index
    %c17 = arith.constant 17 : index
    %c0_4 = arith.constant 0 : index
    %5 = vector.load %arg16[%c0_3, %c17, %c0_4] : memref<6x18x4xbf16, #tpu.memory_space<vmem>>, vector<6x1x4xbf16>
    tpu.vector_store %arg16[%c0_3, %c17, %c0_4], %3 {strides = array<i32>} : memref<6x18x4xbf16, #tpu.memory_space<vmem>>, vector<6x1x4xbf16>,
    %c1_i32_5 = arith.constant 1 : i32
    %6 = arith.addi %2, %c1_i32_5 : i32
    %c0_6 = arith.constant 0 : index
    %7 = arith.index_cast %6 : i32 to index
    %c0_7 = arith.constant 0 : index
    %c0_8 = arith.constant 0 : index
    %8 = vector.load %arg2[%c0_6, %7, %c0_7, %c0_8] : memref<1x16x16x4xbf16, #tpu.memory_space<vmem>>, vector<1x4x16x4xbf16>
    %9 = vector.shape_cast %8 : vector<1x4x16x4xbf16> to vector<64x4xbf16>
    %c0_9 = arith.constant 0 : index
    %c0_10 = arith.constant 0 : index
    %10 = vector.load %arg3[%c0_9, %c0_10] : memref<4x4xbf16, #tpu.memory_space<vmem>>, vector<4x4xbf16>
    %cst_11 = arith.constant dense<0.000000e+00> : vector<64x4xf32>
    %11 = tpu.matmul %9, %10, %cst_11 {dimension_numbers = #tpu.dot_dimension_numbers<[1], [0], [0], [1], [0, 0, 1, 1], [], []>} : vector<64x4xbf16>, vector<4x4xbf16>, vector<64x4xf32> -> vector<64x4xf32>
    %c0_12 = arith.constant 0 : index
    %c0_13 = arith.constant 0 : index
    %12 = vector.load %arg4[%c0_12, %c0_13] : memref<1x4xf32, #tpu.memory_space<vmem>>, vector<1x4xf32>
    %13 = vector.broadcast %12 : vector<1x4xf32> to vector<64x4xf32>
    %14 = arith.mulf %11, %13 : vector<64x4xf32>
    %c0_14 = arith.constant 0 : index
    %c0_15 = arith.constant 0 : index
    %15 = vector.load %arg5[%c0_14, %c0_15] : memref<1x4xf32, #tpu.memory_space<vmem>>, vector<1x4xf32>
    %16 = vector.broadcast %15 : vector<1x4xf32> to vector<64x4xf32>
    %17 = arith.addf %14, %16 : vector<64x4xf32>
    %cst_16 = arith.constant 0.000000e+00 : f32
    %18 = vector.broadcast %cst_16 : f32 to vector<64x4xf32>
    %19 = arith.maximumf %17, %18 : vector<64x4xf32>
    %20 = arith.truncf %19 : vector<64x4xf32> to vector<64x4xbf16>
    %21 = vector.shape_cast %20 : vector<64x4xbf16> to vector<4x16x4xbf16>
    %c1 = arith.constant 1 : index
    %c1_17 = arith.constant 1 : index
    %c0_18 = arith.constant 0 : index
    %22 = vector.load %arg16[%c1, %c1_17, %c0_18] : memref<6x18x4xbf16, #tpu.memory_space<vmem>>, vector<4x16x4xbf16>
    tpu.vector_store %arg16[%c1, %c1_17, %c0_18], %21 {strides = array<i32>} : memref<6x18x4xbf16, #tpu.memory_space<vmem>>, vector<4x16x4xbf16>,
    %c0_i32 = arith.constant 0 : i32
    %23 = arith.maxsi %2, %c0_i32 : i32
    %c0_19 = arith.constant 0 : index
    %24 = arith.index_cast %23 : i32 to index
    %c0_20 = arith.constant 0 : index
    %c0_21 = arith.constant 0 : index
    %25 = vector.load %arg2[%c0_19, %24, %c0_20, %c0_21] : memref<1x16x16x4xbf16, #tpu.memory_space<vmem>>, vector<1x1x16x4xbf16>
    %26 = vector.shape_cast %25 : vector<1x1x16x4xbf16> to vector<16x4xbf16>
    %c0_22 = arith.constant 0 : index
    %c0_23 = arith.constant 0 : index
    %27 = vector.load %arg3[%c0_22, %c0_23] : memref<4x4xbf16, #tpu.memory_space<vmem>>, vector<4x4xbf16>
    %cst_24 = arith.constant dense<0.000000e+00> : vector<16x4xf32>
    %28 = tpu.matmul %26, %27, %cst_24 {dimension_numbers = #tpu.dot_dimension_numbers<[1], [0], [0], [1], [0, 0, 1, 1], [], []>} : vector<16x4xbf16>, vector<4x4xbf16>, vector<16x4xf32> -> vector<16x4xf32>
    %c0_25 = arith.constant 0 : index
    %c0_26 = arith.constant 0 : index
    %29 = vector.load %arg4[%c0_25, %c0_26] : memref<1x4xf32, #tpu.memory_space<vmem>>, vector<1x4xf32>
    %30 = vector.broadcast %29 : vector<1x4xf32> to vector<16x4xf32>
    %31 = arith.mulf %28, %30 : vector<16x4xf32>
    %c0_27 = arith.constant 0 : index
    %c0_28 = arith.constant 0 : index
    %32 = vector.load %arg5[%c0_27, %c0_28] : memref<1x4xf32, #tpu.memory_space<vmem>>, vector<1x4xf32>
    %33 = vector.broadcast %32 : vector<1x4xf32> to vector<16x4xf32>
    %34 = arith.addf %31, %33 : vector<16x4xf32>
    %cst_29 = arith.constant 0.000000e+00 : f32
    %35 = vector.broadcast %cst_29 : f32 to vector<16x4xf32>
    %36 = arith.maximumf %34, %35 : vector<16x4xf32>
    %37 = arith.truncf %36 : vector<16x4xf32> to vector<16x4xbf16>
    %38 = vector.shape_cast %37 : vector<16x4xbf16> to vector<1x16x4xbf16>
    %c0_30 = arith.constant 0 : index
    %c1_31 = arith.constant 1 : index
    %c0_32 = arith.constant 0 : index
    %39 = vector.load %arg16[%c0_30, %c1_31, %c0_32] : memref<6x18x4xbf16, #tpu.memory_space<vmem>>, vector<1x16x4xbf16>
    tpu.vector_store %arg16[%c0_30, %c1_31, %c0_32], %38 {strides = array<i32>} : memref<6x18x4xbf16, #tpu.memory_space<vmem>>, vector<1x16x4xbf16>,
    %c0_i32_33 = arith.constant 0 : i32
    %40 = arith.cmpi eq, %arg1, %c0_i32_33 : i32
    %41 = arith.extui %40 : i1 to i32
    %c0_i32_34 = arith.constant 0 : i32
    %42 = arith.cmpi ne, %41, %c0_i32_34 : i32
    scf.if %42 {
      %cst_119 = arith.constant 0.000000e+00 : bf16
      %132 = vector.broadcast %cst_119 : bf16 to vector<1x18x4xbf16>
      %c0_120 = arith.constant 0 : index
      %c0_121 = arith.constant 0 : index
      %c0_122 = arith.constant 0 : index
      %133 = vector.load %arg16[%c0_120, %c0_121, %c0_122] : memref<6x18x4xbf16, #tpu.memory_space<vmem>>, vector<1x18x4xbf16>
      tpu.vector_store %arg16[%c0_120, %c0_121, %c0_122], %132 {strides = array<i32>} : memref<6x18x4xbf16, #tpu.memory_space<vmem>>, vector<1x18x4xbf16>,
    } else {
    }
    %c6_i32 = arith.constant 6 : i32
    %43 = arith.addi %2, %c6_i32 : i32
    %c1_i32_35 = arith.constant 1 : i32
    %44 = arith.subi %43, %c1_i32_35 : i32
    %c15_i32 = arith.constant 15 : i32
    %45 = arith.minsi %44, %c15_i32 : i32
    %c0_36 = arith.constant 0 : index
    %46 = arith.index_cast %45 : i32 to index
    %c0_37 = arith.constant 0 : index
    %c0_38 = arith.constant 0 : index
    %47 = vector.load %arg2[%c0_36, %46, %c0_37, %c0_38] : memref<1x16x16x4xbf16, #tpu.memory_space<vmem>>, vector<1x1x16x4xbf16>
    %48 = vector.shape_cast %47 : vector<1x1x16x4xbf16> to vector<16x4xbf16>
    %c0_39 = arith.constant 0 : index
    %c0_40 = arith.constant 0 : index
    %49 = vector.load %arg3[%c0_39, %c0_40] : memref<4x4xbf16, #tpu.memory_space<vmem>>, vector<4x4xbf16>
    %cst_41 = arith.constant dense<0.000000e+00> : vector<16x4xf32>
    %50 = tpu.matmul %48, %49, %cst_41 {dimension_numbers = #tpu.dot_dimension_numbers<[1], [0], [0], [1], [0, 0, 1, 1], [], []>} : vector<16x4xbf16>, vector<4x4xbf16>, vector<16x4xf32> -> vector<16x4xf32>
    %c0_42 = arith.constant 0 : index
    %c0_43 = arith.constant 0 : index
    %51 = vector.load %arg4[%c0_42, %c0_43] : memref<1x4xf32, #tpu.memory_space<vmem>>, vector<1x4xf32>
    %52 = vector.broadcast %51 : vector<1x4xf32> to vector<16x4xf32>
    %53 = arith.mulf %50, %52 : vector<16x4xf32>
    %c0_44 = arith.constant 0 : index
    %c0_45 = arith.constant 0 : index
    %54 = vector.load %arg5[%c0_44, %c0_45] : memref<1x4xf32, #tpu.memory_space<vmem>>, vector<1x4xf32>
    %55 = vector.broadcast %54 : vector<1x4xf32> to vector<16x4xf32>
    %56 = arith.addf %53, %55 : vector<16x4xf32>
    %cst_46 = arith.constant 0.000000e+00 : f32
    %57 = vector.broadcast %cst_46 : f32 to vector<16x4xf32>
    %58 = arith.maximumf %56, %57 : vector<16x4xf32>
    %59 = arith.truncf %58 : vector<16x4xf32> to vector<16x4xbf16>
    %60 = vector.shape_cast %59 : vector<16x4xbf16> to vector<1x16x4xbf16>
    %c5 = arith.constant 5 : index
    %c1_47 = arith.constant 1 : index
    %c0_48 = arith.constant 0 : index
    %61 = vector.load %arg16[%c5, %c1_47, %c0_48] : memref<6x18x4xbf16, #tpu.memory_space<vmem>>, vector<1x16x4xbf16>
    tpu.vector_store %arg16[%c5, %c1_47, %c0_48], %60 {strides = array<i32>} : memref<6x18x4xbf16, #tpu.memory_space<vmem>>, vector<1x16x4xbf16>,
    %c16_i32 = arith.constant 16 : i32
    %62 = arith.cmpi sge, %44, %c16_i32 : i32
    %63 = arith.extui %62 : i1 to i32
    %c0_i32_49 = arith.constant 0 : i32
    %64 = arith.cmpi ne, %63, %c0_i32_49 : i32
    scf.if %64 {
      %cst_119 = arith.constant 0.000000e+00 : bf16
      %132 = vector.broadcast %cst_119 : bf16 to vector<1x18x4xbf16>
      %c5_120 = arith.constant 5 : index
      %c0_121 = arith.constant 0 : index
      %c0_122 = arith.constant 0 : index
      %133 = vector.load %arg16[%c5_120, %c0_121, %c0_122] : memref<6x18x4xbf16, #tpu.memory_space<vmem>>, vector<1x18x4xbf16>
      tpu.vector_store %arg16[%c5_120, %c0_121, %c0_122], %132 {strides = array<i32>} : memref<6x18x4xbf16, #tpu.memory_space<vmem>>, vector<1x18x4xbf16>,
    } else {
    }
    %c0_50 = arith.constant 0 : index
    %c0_51 = arith.constant 0 : index
    %c0_52 = arith.constant 0 : index
    %65 = vector.load %arg16[%c0_50, %c0_51, %c0_52] : memref<6x18x4xbf16, #tpu.memory_space<vmem>>, vector<4x16x4xbf16>
    %66 = vector.shape_cast %65 : vector<4x16x4xbf16> to vector<64x4xbf16>
    %c0_53 = arith.constant 0 : index
    %c0_54 = arith.constant 0 : index
    %67 = vector.load %arg17[%c0_53, %c0_54] : memref<64x36xbf16, #tpu.memory_space<vmem>>, vector<64x4xbf16>
    tpu.vector_store %arg17[%c0_53, %c0_54], %66 {strides = array<i32>} : memref<64x36xbf16, #tpu.memory_space<vmem>>, vector<64x4xbf16>,
    %c0_55 = arith.constant 0 : index
    %c1_56 = arith.constant 1 : index
    %c0_57 = arith.constant 0 : index
    %68 = vector.load %arg16[%c0_55, %c1_56, %c0_57] : memref<6x18x4xbf16, #tpu.memory_space<vmem>>, vector<4x16x4xbf16>
    %69 = vector.shape_cast %68 : vector<4x16x4xbf16> to vector<64x4xbf16>
    %c0_58 = arith.constant 0 : index
    %c4 = arith.constant 4 : index
    %70 = vector.load %arg17[%c0_58, %c4] : memref<64x36xbf16, #tpu.memory_space<vmem>>, vector<64x4xbf16>
    tpu.vector_store %arg17[%c0_58, %c4], %69 {strides = array<i32>} : memref<64x36xbf16, #tpu.memory_space<vmem>>, vector<64x4xbf16>,
    %c0_59 = arith.constant 0 : index
    %c2 = arith.constant 2 : index
    %c0_60 = arith.constant 0 : index
    %71 = vector.load %arg16[%c0_59, %c2, %c0_60] : memref<6x18x4xbf16, #tpu.memory_space<vmem>>, vector<4x16x4xbf16>
    %72 = vector.shape_cast %71 : vector<4x16x4xbf16> to vector<64x4xbf16>
    %c0_61 = arith.constant 0 : index
    %c8 = arith.constant 8 : index
    %73 = vector.load %arg17[%c0_61, %c8] : memref<64x36xbf16, #tpu.memory_space<vmem>>, vector<64x4xbf16>
    tpu.vector_store %arg17[%c0_61, %c8], %72 {strides = array<i32>} : memref<64x36xbf16, #tpu.memory_space<vmem>>, vector<64x4xbf16>,
    %c1_62 = arith.constant 1 : index
    %c0_63 = arith.constant 0 : index
    %c0_64 = arith.constant 0 : index
    %74 = vector.load %arg16[%c1_62, %c0_63, %c0_64] : memref<6x18x4xbf16, #tpu.memory_space<vmem>>, vector<4x16x4xbf16>
    %75 = vector.shape_cast %74 : vector<4x16x4xbf16> to vector<64x4xbf16>
    %c0_65 = arith.constant 0 : index
    %c12 = arith.constant 12 : index
    %76 = vector.load %arg17[%c0_65, %c12] : memref<64x36xbf16, #tpu.memory_space<vmem>>, vector<64x4xbf16>
    tpu.vector_store %arg17[%c0_65, %c12], %75 {strides = array<i32>} : memref<64x36xbf16, #tpu.memory_space<vmem>>, vector<64x4xbf16>,
    %c1_66 = arith.constant 1 : index
    %c1_67 = arith.constant 1 : index
    %c0_68 = arith.constant 0 : index
    %77 = vector.load %arg16[%c1_66, %c1_67, %c0_68] : memref<6x18x4xbf16, #tpu.memory_space<vmem>>, vector<4x16x4xbf16>
    %78 = vector.shape_cast %77 : vector<4x16x4xbf16> to vector<64x4xbf16>
    %c0_69 = arith.constant 0 : index
    %c16 = arith.constant 16 : index
    %79 = vector.load %arg17[%c0_69, %c16] : memref<64x36xbf16, #tpu.memory_space<vmem>>, vector<64x4xbf16>
    tpu.vector_store %arg17[%c0_69, %c16], %78 {strides = array<i32>} : memref<64x36xbf16, #tpu.memory_space<vmem>>, vector<64x4xbf16>,
    %c1_70 = arith.constant 1 : index
    %c2_71 = arith.constant 2 : index
    %c0_72 = arith.constant 0 : index
    %80 = vector.load %arg16[%c1_70, %c2_71, %c0_72] : memref<6x18x4xbf16, #tpu.memory_space<vmem>>, vector<4x16x4xbf16>
    %81 = vector.shape_cast %80 : vector<4x16x4xbf16> to vector<64x4xbf16>
    %c0_73 = arith.constant 0 : index
    %c20 = arith.constant 20 : index
    %82 = vector.load %arg17[%c0_73, %c20] : memref<64x36xbf16, #tpu.memory_space<vmem>>, vector<64x4xbf16>
    tpu.vector_store %arg17[%c0_73, %c20], %81 {strides = array<i32>} : memref<64x36xbf16, #tpu.memory_space<vmem>>, vector<64x4xbf16>,
    %c2_74 = arith.constant 2 : index
    %c0_75 = arith.constant 0 : index
    %c0_76 = arith.constant 0 : index
    %83 = vector.load %arg16[%c2_74, %c0_75, %c0_76] : memref<6x18x4xbf16, #tpu.memory_space<vmem>>, vector<4x16x4xbf16>
    %84 = vector.shape_cast %83 : vector<4x16x4xbf16> to vector<64x4xbf16>
    %c0_77 = arith.constant 0 : index
    %c24 = arith.constant 24 : index
    %85 = vector.load %arg17[%c0_77, %c24] : memref<64x36xbf16, #tpu.memory_space<vmem>>, vector<64x4xbf16>
    tpu.vector_store %arg17[%c0_77, %c24], %84 {strides = array<i32>} : memref<64x36xbf16, #tpu.memory_space<vmem>>, vector<64x4xbf16>,
    %c2_78 = arith.constant 2 : index
    %c1_79 = arith.constant 1 : index
    %c0_80 = arith.constant 0 : index
    %86 = vector.load %arg16[%c2_78, %c1_79, %c0_80] : memref<6x18x4xbf16, #tpu.memory_space<vmem>>, vector<4x16x4xbf16>
    %87 = vector.shape_cast %86 : vector<4x16x4xbf16> to vector<64x4xbf16>
    %c0_81 = arith.constant 0 : index
    %c28 = arith.constant 28 : index
    %88 = vector.load %arg17[%c0_81, %c28] : memref<64x36xbf16, #tpu.memory_space<vmem>>, vector<64x4xbf16>
    tpu.vector_store %arg17[%c0_81, %c28], %87 {strides = array<i32>} : memref<64x36xbf16, #tpu.memory_space<vmem>>, vector<64x4xbf16>,
    %c2_82 = arith.constant 2 : index
    %c2_83 = arith.constant 2 : index
    %c0_84 = arith.constant 0 : index
    %89 = vector.load %arg16[%c2_82, %c2_83, %c0_84] : memref<6x18x4xbf16, #tpu.memory_space<vmem>>, vector<4x16x4xbf16>
    %90 = vector.shape_cast %89 : vector<4x16x4xbf16> to vector<64x4xbf16>
    %c0_85 = arith.constant 0 : index
    %c32 = arith.constant 32 : index
    %91 = vector.load %arg17[%c0_85, %c32] : memref<64x36xbf16, #tpu.memory_space<vmem>>, vector<64x4xbf16>
    tpu.vector_store %arg17[%c0_85, %c32], %90 {strides = array<i32>} : memref<64x36xbf16, #tpu.memory_space<vmem>>, vector<64x4xbf16>,
    %c0_86 = arith.constant 0 : index
    %c0_87 = arith.constant 0 : index
    %92 = vector.load %arg17[%c0_86, %c0_87] : memref<64x36xbf16, #tpu.memory_space<vmem>>, vector<64x36xbf16>
    %c0_88 = arith.constant 0 : index
    %c0_89 = arith.constant 0 : index
    %93 = vector.load %arg6[%c0_88, %c0_89] : memref<36x4xbf16, #tpu.memory_space<vmem>>, vector<36x4xbf16>
    %cst_90 = arith.constant dense<0.000000e+00> : vector<64x4xf32>
    %94 = tpu.matmul %92, %93, %cst_90 {dimension_numbers = #tpu.dot_dimension_numbers<[1], [0], [0], [1], [0, 0, 1, 1], [], []>} : vector<64x36xbf16>, vector<36x4xbf16>, vector<64x4xf32> -> vector<64x4xf32>
    %c0_91 = arith.constant 0 : index
    %c0_92 = arith.constant 0 : index
    %95 = vector.load %arg7[%c0_91, %c0_92] : memref<1x4xf32, #tpu.memory_space<vmem>>, vector<1x4xf32>
    %96 = vector.broadcast %95 : vector<1x4xf32> to vector<64x4xf32>
    %97 = arith.mulf %94, %96 : vector<64x4xf32>
    %c0_93 = arith.constant 0 : index
    %c0_94 = arith.constant 0 : index
    %98 = vector.load %arg8[%c0_93, %c0_94] : memref<1x4xf32, #tpu.memory_space<vmem>>, vector<1x4xf32>
    %99 = vector.broadcast %98 : vector<1x4xf32> to vector<64x4xf32>
    %100 = arith.addf %97, %99 : vector<64x4xf32>
    %cst_95 = arith.constant 0.000000e+00 : f32
    %101 = vector.broadcast %cst_95 : f32 to vector<64x4xf32>
    %102 = arith.maximumf %100, %101 : vector<64x4xf32>
    %103 = arith.truncf %102 : vector<64x4xf32> to vector<64x4xbf16>
    %c0_96 = arith.constant 0 : index
    %c0_97 = arith.constant 0 : index
    %104 = vector.load %arg9[%c0_96, %c0_97] : memref<4x16xbf16, #tpu.memory_space<vmem>>, vector<4x16xbf16>
    %cst_98 = arith.constant dense<0.000000e+00> : vector<64x16xf32>
    %105 = tpu.matmul %103, %104, %cst_98 {dimension_numbers = #tpu.dot_dimension_numbers<[1], [0], [0], [1], [0, 0, 1, 1], [], []>} : vector<64x4xbf16>, vector<4x16xbf16>, vector<64x16xf32> -> vector<64x16xf32>
    %c0_99 = arith.constant 0 : index
    %c0_100 = arith.constant 0 : index
    %106 = vector.load %arg10[%c0_99, %c0_100] : memref<1x16xf32, #tpu.memory_space<vmem>>, vector<1x16xf32>
    %107 = vector.broadcast %106 : vector<1x16xf32> to vector<64x16xf32>
    %108 = arith.mulf %105, %107 : vector<64x16xf32>
    %c0_101 = arith.constant 0 : index
    %c0_102 = arith.constant 0 : index
    %109 = vector.load %arg11[%c0_101, %c0_102] : memref<1x16xf32, #tpu.memory_space<vmem>>, vector<1x16xf32>
    %110 = vector.broadcast %109 : vector<1x16xf32> to vector<64x16xf32>
    %111 = arith.addf %108, %110 : vector<64x16xf32>
    %c1_i32_103 = arith.constant 1 : i32
    %112 = arith.addi %2, %c1_i32_103 : i32
    %c0_104 = arith.constant 0 : index
    %113 = arith.index_cast %112 : i32 to index
    %c0_105 = arith.constant 0 : index
    %c0_106 = arith.constant 0 : index
    %114 = vector.load %arg2[%c0_104, %113, %c0_105, %c0_106] : memref<1x16x16x4xbf16, #tpu.memory_space<vmem>>, vector<1x4x16x4xbf16>
    %115 = vector.shape_cast %114 : vector<1x4x16x4xbf16> to vector<4x16x4xbf16>
    %116 = vector.extract_strided_slice %115 {offsets = [0, 0, 0], sizes = [4, 16, 4], strides = [1, 1, 1]} : vector<4x16x4xbf16> to vector<4x16x4xbf16>
    %117 = vector.shape_cast %116 : vector<4x16x4xbf16> to vector<64x4xbf16>
    %c0_107 = arith.constant 0 : index
    %c0_108 = arith.constant 0 : index
    %118 = vector.load %arg12[%c0_107, %c0_108] : memref<4x16xbf16, #tpu.memory_space<vmem>>, vector<4x16xbf16>
    %cst_109 = arith.constant dense<0.000000e+00> : vector<64x16xf32>
    %119 = tpu.matmul %117, %118, %cst_109 {dimension_numbers = #tpu.dot_dimension_numbers<[1], [0], [0], [1], [0, 0, 1, 1], [], []>} : vector<64x4xbf16>, vector<4x16xbf16>, vector<64x16xf32> -> vector<64x16xf32>
    %c0_110 = arith.constant 0 : index
    %c0_111 = arith.constant 0 : index
    %120 = vector.load %arg13[%c0_110, %c0_111] : memref<1x16xf32, #tpu.memory_space<vmem>>, vector<1x16xf32>
    %121 = vector.broadcast %120 : vector<1x16xf32> to vector<64x16xf32>
    %122 = arith.mulf %119, %121 : vector<64x16xf32>
    %c0_112 = arith.constant 0 : index
    %c0_113 = arith.constant 0 : index
    %123 = vector.load %arg14[%c0_112, %c0_113] : memref<1x16xf32, #tpu.memory_space<vmem>>, vector<1x16xf32>
    %124 = vector.broadcast %123 : vector<1x16xf32> to vector<64x16xf32>
    %125 = arith.addf %122, %124 : vector<64x16xf32>
    %126 = arith.addf %111, %125 : vector<64x16xf32>
    %cst_114 = arith.constant 0.000000e+00 : f32
    %127 = vector.broadcast %cst_114 : f32 to vector<64x16xf32>
    %128 = arith.maximumf %126, %127 : vector<64x16xf32>
    %129 = vector.shape_cast %128 : vector<64x16xf32> to vector<1x4x16x16xf32>
    %130 = arith.truncf %129 : vector<1x4x16x16xf32> to vector<1x4x16x16xbf16>
    %c0_115 = arith.constant 0 : index
    %c0_116 = arith.constant 0 : index
    %c0_117 = arith.constant 0 : index
    %c0_118 = arith.constant 0 : index
    %131 = vector.load %arg15[%c0_115, %c0_116, %c0_117, %c0_118] : memref<1x4x16x16xbf16, #tpu.memory_space<vmem>>, vector<1x4x16x16xbf16>
    tpu.vector_store %arg15[%c0_115, %c0_116, %c0_117, %c0_118], %130 {strides = array<i32>} : memref<1x4x16x16xbf16, #tpu.memory_space<vmem>>, vector<1x4x16x16xbf16>,
    return
  }
  func.func @transform_0(%arg0: i32, %arg1: i32) -> (i32, i32, i32, i32) {
    %c0_i32 = arith.constant 0 : i32
    %c0_i32_0 = arith.constant 0 : i32
    %c0_i32_1 = arith.constant 0 : i32
    %c0_i32_2 = arith.constant 0 : i32
    return %arg0, %c0_i32, %c0_i32_0, %c0_i32_1 : i32, i32, i32, i32
  }
  func.func @transform_1(%arg0: i32, %arg1: i32) -> (i32, i32) {
    %c0_i32 = arith.constant 0 : i32
    %c0_i32_0 = arith.constant 0 : i32
    %c0_i32_1 = arith.constant 0 : i32
    return %c0_i32, %c0_i32_0 : i32, i32
  }
  func.func @transform_2(%arg0: i32, %arg1: i32) -> (i32, i32) {
    %c0_i32 = arith.constant 0 : i32
    %c0_i32_0 = arith.constant 0 : i32
    %c0_i32_1 = arith.constant 0 : i32
    return %c0_i32, %c0_i32_0 : i32, i32
  }
  func.func @transform_3(%arg0: i32, %arg1: i32) -> (i32, i32) {
    %c0_i32 = arith.constant 0 : i32
    %c0_i32_0 = arith.constant 0 : i32
    %c0_i32_1 = arith.constant 0 : i32
    return %c0_i32, %c0_i32_0 : i32, i32
  }
  func.func @transform_4(%arg0: i32, %arg1: i32) -> (i32, i32) {
    %c0_i32 = arith.constant 0 : i32
    %c0_i32_0 = arith.constant 0 : i32
    %c0_i32_1 = arith.constant 0 : i32
    return %c0_i32, %c0_i32_0 : i32, i32
  }
  func.func @transform_5(%arg0: i32, %arg1: i32) -> (i32, i32) {
    %c0_i32 = arith.constant 0 : i32
    %c0_i32_0 = arith.constant 0 : i32
    %c0_i32_1 = arith.constant 0 : i32
    return %c0_i32, %c0_i32_0 : i32, i32
  }
  func.func @transform_6(%arg0: i32, %arg1: i32) -> (i32, i32) {
    %c0_i32 = arith.constant 0 : i32
    %c0_i32_0 = arith.constant 0 : i32
    %c0_i32_1 = arith.constant 0 : i32
    return %c0_i32, %c0_i32_0 : i32, i32
  }
  func.func @transform_7(%arg0: i32, %arg1: i32) -> (i32, i32) {
    %c0_i32 = arith.constant 0 : i32
    %c0_i32_0 = arith.constant 0 : i32
    %c0_i32_1 = arith.constant 0 : i32
    return %c0_i32, %c0_i32_0 : i32, i32
  }
  func.func @transform_8(%arg0: i32, %arg1: i32) -> (i32, i32) {
    %c0_i32 = arith.constant 0 : i32
    %c0_i32_0 = arith.constant 0 : i32
    %c0_i32_1 = arith.constant 0 : i32
    return %c0_i32, %c0_i32_0 : i32, i32
  }
  func.func @transform_9(%arg0: i32, %arg1: i32) -> (i32, i32) {
    %c0_i32 = arith.constant 0 : i32
    %c0_i32_0 = arith.constant 0 : i32
    %c0_i32_1 = arith.constant 0 : i32
    return %c0_i32, %c0_i32_0 : i32, i32
  }
  func.func @transform_10(%arg0: i32, %arg1: i32) -> (i32, i32) {
    %c0_i32 = arith.constant 0 : i32
    %c0_i32_0 = arith.constant 0 : i32
    %c0_i32_1 = arith.constant 0 : i32
    return %c0_i32, %c0_i32_0 : i32, i32
  }
  func.func @transform_11(%arg0: i32, %arg1: i32) -> (i32, i32) {
    %c0_i32 = arith.constant 0 : i32
    %c0_i32_0 = arith.constant 0 : i32
    %c0_i32_1 = arith.constant 0 : i32
    return %c0_i32, %c0_i32_0 : i32, i32
  }
  func.func @transform_12(%arg0: i32, %arg1: i32) -> (i32, i32) {
    %c0_i32 = arith.constant 0 : i32
    %c0_i32_0 = arith.constant 0 : i32
    %c0_i32_1 = arith.constant 0 : i32
    return %c0_i32, %c0_i32_0 : i32, i32
  }
  func.func @transform_13(%arg0: i32, %arg1: i32) -> (i32, i32, i32, i32) {
    %c0_i32 = arith.constant 0 : i32
    %c0_i32_0 = arith.constant 0 : i32
    %c0_i32_1 = arith.constant 0 : i32
    return %arg0, %arg1, %c0_i32, %c0_i32_0 : i32, i32, i32, i32
  }
}

</mosaic_0001>

<llo_original>
// kernel: tpu_custom_call.1
$region0: #{tpu_custom_call.1}
  #allocation0 [shape = 'u32[]', space=smem, size = 0x4, offset = 0x4, fixed_abs, tag = 'smem constant byte address 0x4 - core index']
  #allocation1 [shape = 'u32[72,128]{1,0:T(1,128)}', space=vmem, size = 0x9000, scoped, tag = 'internal scratch']
  #allocation2 [shape = 'bf16[6,18,4]{2,1,0:T(8,128)(2,1)}', space=vmem, size = 0x9000, scoped, tag = 'scratch operand']
  #allocation3 [shape = 'bf16[64,36]{1,0:T(8,128)(2,1)}', space=vmem, size = 0x4000, scoped, tag = 'scratch operand']
  %s0 = inlined_call_operand.vmem [shape: bf16[2,16,16,4], index: 0, kind: input, shape index: {}]
  %s1 = inlined_call_operand.vmem [shape: bf16[4,4], index: 1, kind: input, shape index: {}]
  %s2 = inlined_call_operand.vmem [shape: f32[1,4], index: 2, kind: input, shape index: {}]
  %s3 = inlined_call_operand.vmem [shape: f32[1,4], index: 3, kind: input, shape index: {}]
  %s4 = inlined_call_operand.vmem [shape: bf16[36,4], index: 4, kind: input, shape index: {}]
  %s5 = inlined_call_operand.vmem [shape: f32[1,4], index: 5, kind: input, shape index: {}]
  %s6 = inlined_call_operand.vmem [shape: f32[1,4], index: 6, kind: input, shape index: {}]
  %s7 = inlined_call_operand.vmem [shape: bf16[4,16], index: 7, kind: input, shape index: {}]
  %s8 = inlined_call_operand.vmem [shape: f32[1,16], index: 8, kind: input, shape index: {}]
  %s9 = inlined_call_operand.vmem [shape: f32[1,16], index: 9, kind: input, shape index: {}]
  %s10 = inlined_call_operand.vmem [shape: bf16[4,16], index: 10, kind: input, shape index: {}]
  %s11 = inlined_call_operand.vmem [shape: f32[1,16], index: 11, kind: input, shape index: {}]
  %s12 = inlined_call_operand.vmem [shape: f32[1,16], index: 12, kind: input, shape index: {}]
  %s13 = inlined_call_operand.hbm [shape: bf16[2,16,16,16], index: 13, kind: output, shape index: {}]
  %s14 = sld [smem:[#allocation0]]
  $region93: #{tpu_custom_call.1} parent=0
    _
  %s16 = ssub.s32 1, %s14
  %s17 = scalar_select 0, %s16, %s14
  $region1: #{tpu_custom_call.1} parent=0
    #allocation4 [shape = 'u8[32768]{0}', space=vmem, size = 0x8000, scoped, tag = 'output window, operand 0']
    #allocation5 [shape = 's32[2]{0}', space=sflag, size = 0x8, scoped, tag = 'scoped memory for tpu_custom_call.1']
    %18 = vsyncpa [#allocation5], 0
    %s19 = scalar_lea.sflag [#allocation5], 1
    %20 = vsyncpa %s19, 0
    loop: start=0, step=1, limit=10
    $region2: #{tpu_custom_call.1} parent=1 // loop_pre_header
      _
    $region3: #{tpu_custom_call.1} parent=1 // loop_header
      %s22 = sphi 0, %s26
      %p23 = scmp.ge.s32.totalorder %s22, 10
      %s29 = sphi 0, %s41
      %s30 = sphi 0, %s37
      %s31 = sphi 0, %s29
      %s32 = sphi 0, %s30
      %s33 = sphi 0, %s31
      %s34 = sphi 0, %s32
      %s44 = sphi 0, %s46
      %s47 = sphi 0, %s44
      %s48 = sphi 0, %s47
      %s64 = sphi 0, %s48
      %s68 = sphi 0, %s68
      %s70 = sphi 0, %s68
      %s71 = sphi 0, %s70
      %s85 = sphi 0, %s71
      %s89 = sphi 0, %s89
      %s91 = sphi 0, %s89
      %s92 = sphi 0, %s91
      %s106 = sphi 0, %s92
      %s110 = sphi 0, %s110
      %s112 = sphi 0, %s110
      %s113 = sphi 0, %s112
      %s127 = sphi 0, %s113
      %s131 = sphi 0, %s131
      %s133 = sphi 0, %s131
      %s134 = sphi 0, %s133
      %s148 = sphi 0, %s134
      %s152 = sphi 0, %s152
      %s154 = sphi 0, %s152
      %s155 = sphi 0, %s154
      %s169 = sphi 0, %s155
      %s173 = sphi 0, %s173
      %s175 = sphi 0, %s173
      %s176 = sphi 0, %s175
      %s190 = sphi 0, %s176
      %s194 = sphi 0, %s194
      %s196 = sphi 0, %s194
      %s197 = sphi 0, %s196
      %s211 = sphi 0, %s197
      %s215 = sphi 0, %s215
      %s217 = sphi 0, %s215
      %s218 = sphi 0, %s217
      %s232 = sphi 0, %s218
      %s236 = sphi 0, %s236
      %s238 = sphi 0, %s236
      %s239 = sphi 0, %s238
      %s253 = sphi 0, %s239
      %s257 = sphi 0, %s257
      %s259 = sphi 0, %s257
      %s260 = sphi 0, %s259
      %s274 = sphi 0, %s260
      %s278 = sphi 0, %s278
      %s280 = sphi 0, %s278
      %s281 = sphi 0, %s280
      %s295 = sphi 0, %s281
      %s299 = sphi 0, %s299
      %s301 = sphi 0, %s299
      %s302 = sphi 0, %s301
      %s316 = sphi 0, %s302
      %s324 = sphi 0, %s326
      %s327 = sphi 0, %s324
      %s328 = sphi 0, %s327
      %s344 = sphi 0, %s328
    $region4: #{tpu_custom_call.1} parent=1 // loop_header_branch
      %25 = sbr.rel (%p23) target = $region8
    $region5: #{tpu_custom_call.1} parent=1 // loop_body
      %s27 = ssub.s32 %s22, 1
      %s28 = ssub.s32 %s22, 2
      %s35 = sadd.s32 1, %s30
      %p36 = scmp.ge.s32.totalorder %s35, 4
      %s37 = scalar_select %p36, 0, %s35
      %s38 = sadd.s32 1, %s29
      %s39 = scalar_select %p36, %s38, %s29
      %p40 = scmp.ge.s32.totalorder %s39, 2
      %s41 = scalar_select %p40, 0, %s39
      %s42 = ssub.s32 %s29, %s41
      %p43 = scmp.eq.s32.totalorder %s42, 0
      %s45 = sadd.s32 %s44, 1
      %s46 = scalar_select %p43, %s44, %s45
      %p49 = pneg %p43
      %p50 = scmp.eq.s32.totalorder %s22, 7
      %p51 = por %p49, %p50
      %p52 = scmp.ne.s32.totalorder %s44, %s47
      %p53 = scmp.eq.s32.totalorder %s22, 0
      %p54 = por %p52, %p53
      %p55 = scmp.ne.s32.totalorder %s44, %s47
      %p56 = scmp.eq.s32.totalorder %s27, 7
      %p57 = por %p55, %p56
      %p58 = scmp.ne.s32.totalorder %s47, %s48
      %p59 = scmp.eq.s32.totalorder %s27, 0
      %p60 = por %p58, %p59
      %p61 = scmp.ne.s32.totalorder %s47, %s48
      %p62 = scmp.eq.s32.totalorder %s28, 7
      %p63 = por %p61, %p62
      %p65 = scmp.ne.s32.totalorder %s48, %s64
      %p66 = scmp.eq.s32.totalorder %s28, 0
      %p67 = por %p65, %p66
      %s69 = sadd.s32 %s68, 1
      %p72 = scmp.eq.s32.totalorder %s22, 7
      %p73 = scmp.ne.s32.totalorder %s68, %s70
      %p74 = scmp.eq.s32.totalorder %s22, 0
      %p75 = por %p73, %p74
      %p76 = scmp.ne.s32.totalorder %s68, %s70
      %p77 = scmp.eq.s32.totalorder %s27, 7
      %p78 = por %p76, %p77
      %p79 = scmp.ne.s32.totalorder %s70, %s71
      %p80 = scmp.eq.s32.totalorder %s27, 0
      %p81 = por %p79, %p80
      %p82 = scmp.ne.s32.totalorder %s70, %s71
      %p83 = scmp.eq.s32.totalorder %s28, 7
      %p84 = por %p82, %p83
      %p86 = scmp.ne.s32.totalorder %s71, %s85
      %p87 = scmp.eq.s32.totalorder %s28, 0
      %p88 = por %p86, %p87
      %s90 = sadd.s32 %s89, 1
      %p93 = scmp.eq.s32.totalorder %s22, 7
      %p94 = scmp.ne.s32.totalorder %s89, %s91
      %p95 = scmp.eq.s32.totalorder %s22, 0
      %p96 = por %p94, %p95
      %p97 = scmp.ne.s32.totalorder %s89, %s91
      %p98 = scmp.eq.s32.totalorder %s27, 7
      %p99 = por %p97, %p98
      %p100 = scmp.ne.s32.totalorder %s91, %s92
      %p101 = scmp.eq.s32.totalorder %s27, 0
      %p102 = por %p100, %p101
      %p103 = scmp.ne.s32.totalorder %s91, %s92
      %p104 = scmp.eq.s32.totalorder %s28, 7
      %p105 = por %p103, %p104
      %p107 = scmp.ne.s32.totalorder %s92, %s106
      %p108 = scmp.eq.s32.totalorder %s28, 0
      %p109 = por %p107, %p108
      %s111 = sadd.s32 %s110, 1
      %p114 = scmp.eq.s32.totalorder %s22, 7
      %p115 = scmp.ne.s32.totalorder %s110, %s112
      %p116 = scmp.eq.s32.totalorder %s22, 0
      %p117 = por %p115, %p116
      %p118 = scmp.ne.s32.totalorder %s110, %s112
      %p119 = scmp.eq.s32.totalorder %s27, 7
      %p120 = por %p118, %p119
      %p121 = scmp.ne.s32.totalorder %s112, %s113
      %p122 = scmp.eq.s32.totalorder %s27, 0
      %p123 = por %p121, %p122
      %p124 = scmp.ne.s32.totalorder %s112, %s113
      %p125 = scmp.eq.s32.totalorder %s28, 7
      %p126 = por %p124, %p125
      %p128 = scmp.ne.s32.totalorder %s113, %s127
      %p129 = scmp.eq.s32.totalorder %s28, 0
      %p130 = por %p128, %p129
      %s132 = sadd.s32 %s131, 1
      %p135 = scmp.eq.s32.totalorder %s22, 7
      %p136 = scmp.ne.s32.totalorder %s131, %s133
      %p137 = scmp.eq.s32.totalorder %s22, 0
      %p138 = por %p136, %p137
      %p139 = scmp.ne.s32.totalorder %s131, %s133
      %p140 = scmp.eq.s32.totalorder %s27, 7
      %p141 = por %p139, %p140
      %p142 = scmp.ne.s32.totalorder %s133, %s134
      %p143 = scmp.eq.s32.totalorder %s27, 0
      %p144 = por %p142, %p143
      %p145 = scmp.ne.s32.totalorder %s133, %s134
      %p146 = scmp.eq.s32.totalorder %s28, 7
      %p147 = por %p145, %p146
      %p149 = scmp.ne.s32.totalorder %s134, %s148
      %p150 = scmp.eq.s32.totalorder %s28, 0
      %p151 = por %p149, %p150
      %s153 = sadd.s32 %s152, 1
      %p156 = scmp.eq.s32.totalorder %s22, 7
      %p157 = scmp.ne.s32.totalorder %s152, %s154
      %p158 = scmp.eq.s32.totalorder %s22, 0
      %p159 = por %p157, %p158
      %p160 = scmp.ne.s32.totalorder %s152, %s154
      %p161 = scmp.eq.s32.totalorder %s27, 7
      %p162 = por %p160, %p161
      %p163 = scmp.ne.s32.totalorder %s154, %s155
      %p164 = scmp.eq.s32.totalorder %s27, 0
      %p165 = por %p163, %p164
      %p166 = scmp.ne.s32.totalorder %s154, %s155
      %p167 = scmp.eq.s32.totalorder %s28, 7
      %p168 = por %p166, %p167
      %p170 = scmp.ne.s32.totalorder %s155, %s169
      %p171 = scmp.eq.s32.totalorder %s28, 0
      %p172 = por %p170, %p171
      %s174 = sadd.s32 %s173, 1
      %p177 = scmp.eq.s32.totalorder %s22, 7
      %p178 = scmp.ne.s32.totalorder %s173, %s175
      %p179 = scmp.eq.s32.totalorder %s22, 0
      %p180 = por %p178, %p179
      %p181 = scmp.ne.s32.totalorder %s173, %s175
      %p182 = scmp.eq.s32.totalorder %s27, 7
      %p183 = por %p181, %p182
      %p184 = scmp.ne.s32.totalorder %s175, %s176
      %p185 = scmp.eq.s32.totalorder %s27, 0
      %p186 = por %p184, %p185
      %p187 = scmp.ne.s32.totalorder %s175, %s176
      %p188 = scmp.eq.s32.totalorder %s28, 7
      %p189 = por %p187, %p188
      %p191 = scmp.ne.s32.totalorder %s176, %s190
      %p192 = scmp.eq.s32.totalorder %s28, 0
      %p193 = por %p191, %p192
      %s195 = sadd.s32 %s194, 1
      %p198 = scmp.eq.s32.totalorder %s22, 7
      %p199 = scmp.ne.s32.totalorder %s194, %s196
      %p200 = scmp.eq.s32.totalorder %s22, 0
      %p201 = por %p199, %p200
      %p202 = scmp.ne.s32.totalorder %s194, %s196
      %p203 = scmp.eq.s32.totalorder %s27, 7
      %p204 = por %p202, %p203
      %p205 = scmp.ne.s32.totalorder %s196, %s197
      %p206 = scmp.eq.s32.totalorder %s27, 0
      %p207 = por %p205, %p206
      %p208 = scmp.ne.s32.totalorder %s196, %s197
      %p209 = scmp.eq.s32.totalorder %s28, 7
      %p210 = por %p208, %p209
      %p212 = scmp.ne.s32.totalorder %s197, %s211
      %p213 = scmp.eq.s32.totalorder %s28, 0
      %p214 = por %p212, %p213
      %s216 = sadd.s32 %s215, 1
      %p219 = scmp.eq.s32.totalorder %s22, 7
      %p220 = scmp.ne.s32.totalorder %s215, %s217
      %p221 = scmp.eq.s32.totalorder %s22, 0
      %p222 = por %p220, %p221
      %p223 = scmp.ne.s32.totalorder %s215, %s217
      %p224 = scmp.eq.s32.totalorder %s27, 7
      %p225 = por %p223, %p224
      %p226 = scmp.ne.s32.totalorder %s217, %s218
      %p227 = scmp.eq.s32.totalorder %s27, 0
      %p228 = por %p226, %p227
      %p229 = scmp.ne.s32.totalorder %s217, %s218
      %p230 = scmp.eq.s32.totalorder %s28, 7
      %p231 = por %p229, %p230
      %p233 = scmp.ne.s32.totalorder %s218, %s232
      %p234 = scmp.eq.s32.totalorder %s28, 0
      %p235 = por %p233, %p234
      %s237 = sadd.s32 %s236, 1
      %p240 = scmp.eq.s32.totalorder %s22, 7
      %p241 = scmp.ne.s32.totalorder %s236, %s238
      %p242 = scmp.eq.s32.totalorder %s22, 0
      %p243 = por %p241, %p242
      %p244 = scmp.ne.s32.totalorder %s236, %s238
      %p245 = scmp.eq.s32.totalorder %s27, 7
      %p246 = por %p244, %p245
      %p247 = scmp.ne.s32.totalorder %s238, %s239
      %p248 = scmp.eq.s32.totalorder %s27, 0
      %p249 = por %p247, %p248
      %p250 = scmp.ne.s32.totalorder %s238, %s239
      %p251 = scmp.eq.s32.totalorder %s28, 7
      %p252 = por %p250, %p251
      %p254 = scmp.ne.s32.totalorder %s239, %s253
      %p255 = scmp.eq.s32.totalorder %s28, 0
      %p256 = por %p254, %p255
      %s258 = sadd.s32 %s257, 1
      %p261 = scmp.eq.s32.totalorder %s22, 7
      %p262 = scmp.ne.s32.totalorder %s257, %s259
      %p263 = scmp.eq.s32.totalorder %s22, 0
      %p264 = por %p262, %p263
      %p265 = scmp.ne.s32.totalorder %s257, %s259
      %p266 = scmp.eq.s32.totalorder %s27, 7
      %p267 = por %p265, %p266
      %p268 = scmp.ne.s32.totalorder %s259, %s260
      %p269 = scmp.eq.s32.totalorder %s27, 0
      %p270 = por %p268, %p269
      %p271 = scmp.ne.s32.totalorder %s259, %s260
      %p272 = scmp.eq.s32.totalorder %s28, 7
      %p273 = por %p271, %p272
      %p275 = scmp.ne.s32.totalorder %s260, %s274
      %p276 = scmp.eq.s32.totalorder %s28, 0
      %p277 = por %p275, %p276
      %s279 = sadd.s32 %s278, 1
      %p282 = scmp.eq.s32.totalorder %s22, 7
      %p283 = scmp.ne.s32.totalorder %s278, %s280
      %p284 = scmp.eq.s32.totalorder %s22, 0
      %p285 = por %p283, %p284
      %p286 = scmp.ne.s32.totalorder %s278, %s280
      %p287 = scmp.eq.s32.totalorder %s27, 7
      %p288 = por %p286, %p287
      %p289 = scmp.ne.s32.totalorder %s280, %s281
      %p290 = scmp.eq.s32.totalorder %s27, 0
      %p291 = por %p289, %p290
      %p292 = scmp.ne.s32.totalorder %s280, %s281
      %p293 = scmp.eq.s32.totalorder %s28, 7
      %p294 = por %p292, %p293
      %p296 = scmp.ne.s32.totalorder %s281, %s295
      %p297 = scmp.eq.s32.totalorder %s28, 0
      %p298 = por %p296, %p297
      %s300 = sadd.s32 %s299, 1
      %p303 = scmp.eq.s32.totalorder %s22, 7
      %p304 = scmp.ne.s32.totalorder %s299, %s301
      %p305 = scmp.eq.s32.totalorder %s22, 0
      %p306 = por %p304, %p305
      %p307 = scmp.ne.s32.totalorder %s299, %s301
      %p308 = scmp.eq.s32.totalorder %s27, 7
      %p309 = por %p307, %p308
      %p310 = scmp.ne.s32.totalorder %s301, %s302
      %p311 = scmp.eq.s32.totalorder %s27, 0
      %p312 = por %p310, %p311
      %p313 = scmp.ne.s32.totalorder %s301, %s302
      %p314 = scmp.eq.s32.totalorder %s28, 7
      %p315 = por %p313, %p314
      %p317 = scmp.ne.s32.totalorder %s302, %s316
      %p318 = scmp.eq.s32.totalorder %s28, 0
      %p319 = por %p317, %p318
      %s320 = ssub.s32 %s29, %s41
      %s321 = ssub.s32 %s30, %s37
      %s322 = sor.u32 %s320, %s321
      %p323 = scmp.eq.s32.totalorder %s322, 0
      %s325 = sadd.s32 %s324, 1
      %s326 = scalar_select %p323, %s324, %s325
      %p329 = pneg %p323
      %p330 = scmp.eq.s32.totalorder %s22, 7
      %p331 = por %p329, %p330
      %p332 = scmp.ne.s32.totalorder %s324, %s327
      %p333 = scmp.eq.s32.totalorder %s22, 0
      %p334 = por %p332, %p333
      %p335 = scmp.ne.s32.totalorder %s324, %s327
      %p336 = scmp.eq.s32.totalorder %s27, 7
      %p337 = por %p335, %p336
      %p338 = scmp.ne.s32.totalorder %s327, %s328
      %p339 = scmp.eq.s32.totalorder %s27, 0
      %p340 = por %p338, %p339
      %p341 = scmp.ne.s32.totalorder %s327, %s328
      %p342 = scmp.eq.s32.totalorder %s28, 7
      %p343 = por %p341, %p342
      %p345 = scmp.ne.s32.totalorder %s328, %s344
      %p346 = scmp.eq.s32.totalorder %s28, 0
      %p347 = por %p345, %p346
      %p348 = scmp.le.s32.totalorder 1, %s22
      %p349 = scmp.lt.s32.totalorder %s22, 9
      %p350 = pnand %p348, %p349
      %p351 = pneg %p350
      // Predicated region
      $region9: #{tpu_custom_call.1} parent=5 // pred_check
        _
      $region10: #{tpu_custom_call.1} parent=5 // pred_check_branch
        %353 = sbr.rel (%p350) target = $region12
      $region11: #{tpu_custom_call.1} parent=5 // pred_region
        %s354 = ssub.s32 %s22, 1
        // Predicated region
        $region13: #{tpu_custom_call.1} parent=11 // pred_check
          %p355 = pneg %p81
        $region14: #{tpu_custom_call.1} parent=11 // pred_check_branch
          %357 = sbr.rel (%p355) target = $region16
        $region15: #{tpu_custom_call.1} parent=11 // pred_region
          _
        $region16: #{tpu_custom_call.1} parent=11 // pred_fallthru
          _
        // Predicated region
        $region17: #{tpu_custom_call.1} parent=11 // pred_check
          %p358 = pneg %p102
        $region18: #{tpu_custom_call.1} parent=11 // pred_check_branch
          %360 = sbr.rel (%p358) target = $region20
        $region19: #{tpu_custom_call.1} parent=11 // pred_region
          _
        $region20: #{tpu_custom_call.1} parent=11 // pred_fallthru
          _
        // Predicated region
        $region21: #{tpu_custom_call.1} parent=11 // pred_check
          %p361 = pneg %p123
        $region22: #{tpu_custom_call.1} parent=11 // pred_check_branch
          %363 = sbr.rel (%p361) target = $region24
        $region23: #{tpu_custom_call.1} parent=11 // pred_region
          _
        $region24: #{tpu_custom_call.1} parent=11 // pred_fallthru
          _
        // Predicated region
        $region25: #{tpu_custom_call.1} parent=11 // pred_check
          %p364 = pneg %p144
        $region26: #{tpu_custom_call.1} parent=11 // pred_check_branch
          %366 = sbr.rel (%p364) target = $region28
        $region27: #{tpu_custom_call.1} parent=11 // pred_region
          _
        $region28: #{tpu_custom_call.1} parent=11 // pred_fallthru
          _
        // Predicated region
        $region29: #{tpu_custom_call.1} parent=11 // pred_check
          %p367 = pneg %p165
        $region30: #{tpu_custom_call.1} parent=11 // pred_check_branch
          %369 = sbr.rel (%p367) target = $region32
        $region31: #{tpu_custom_call.1} parent=11 // pred_region
          _
        $region32: #{tpu_custom_call.1} parent=11 // pred_fallthru
          _
        // Predicated region
        $region33: #{tpu_custom_call.1} parent=11 // pred_check
          %p370 = pneg %p186
        $region34: #{tpu_custom_call.1} parent=11 // pred_check_branch
          %372 = sbr.rel (%p370) target = $region36
        $region35: #{tpu_custom_call.1} parent=11 // pred_region
          _
        $region36: #{tpu_custom_call.1} parent=11 // pred_fallthru
          _
        // Predicated region
        $region37: #{tpu_custom_call.1} parent=11 // pred_check
          %p373 = pneg %p207
        $region38: #{tpu_custom_call.1} parent=11 // pred_check_branch
          %375 = sbr.rel (%p373) target = $region40
        $region39: #{tpu_custom_call.1} parent=11 // pred_region
          _
        $region40: #{tpu_custom_call.1} parent=11 // pred_fallthru
          _
        // Predicated region
        $region41: #{tpu_custom_call.1} parent=11 // pred_check
          %p376 = pneg %p228
        $region42: #{tpu_custom_call.1} parent=11 // pred_check_branch
          %378 = sbr.rel (%p376) target = $region44
        $region43: #{tpu_custom_call.1} parent=11 // pred_region
          _
        $region44: #{tpu_custom_call.1} parent=11 // pred_fallthru
          _
        // Predicated region
        $region45: #{tpu_custom_call.1} parent=11 // pred_check
          %p379 = pneg %p249
        $region46: #{tpu_custom_call.1} parent=11 // pred_check_branch
          %381 = sbr.rel (%p379) target = $region48
        $region47: #{tpu_custom_call.1} parent=11 // pred_region
          _
        $region48: #{tpu_custom_call.1} parent=11 // pred_fallthru
          _
        // Predicated region
        $region49: #{tpu_custom_call.1} parent=11 // pred_check
          %p382 = pneg %p270
        $region50: #{tpu_custom_call.1} parent=11 // pred_check_branch
          %384 = sbr.rel (%p382) target = $region52
        $region51: #{tpu_custom_call.1} parent=11 // pred_region
          _
        $region52: #{tpu_custom_call.1} parent=11 // pred_fallthru
          _
        // Predicated region
        $region53: #{tpu_custom_call.1} parent=11 // pred_check
          %p385 = pneg %p291
        $region54: #{tpu_custom_call.1} parent=11 // pred_check_branch
          %387 = sbr.rel (%p385) target = $region56
        $region55: #{tpu_custom_call.1} parent=11 // pred_region
          _
        $region56: #{tpu_custom_call.1} parent=11 // pred_fallthru
          _
        // Predicated region
        $region57: #{tpu_custom_call.1} parent=11 // pred_check
          %p388 = pneg %p312
        $region58: #{tpu_custom_call.1} parent=11 // pred_check_branch
          %390 = sbr.rel (%p388) target = $region60
        $region59: #{tpu_custom_call.1} parent=11 // pred_region
          _
        $region60: #{tpu_custom_call.1} parent=11 // pred_fallthru
          _
      $region12: #{tpu_custom_call.1} parent=5 // pred_fallthru
        _
      %p391 = scmp.lt.s32.totalorder %s22, 8
      // Predicated region
      $region61: #{tpu_custom_call.1} parent=5 // pred_check
        %p392 = pneg %p391
      $region62: #{tpu_custom_call.1} parent=5 // pred_check_branch
        %394 = sbr.rel (%p392) target = $region64
      $region63: #{tpu_custom_call.1} parent=5 // pred_region
        // Predicated region
        $region65: #{tpu_custom_call.1} parent=63 // pred_check
          %p395 = pneg %p54
        $region66: #{tpu_custom_call.1} parent=63 // pred_check_branch
          %397 = sbr.rel (%p395) target = $region68
        $region67: #{tpu_custom_call.1} parent=63 // pred_region
          %p398 = scmp.lt.s32.totalorder %s29, 1
          %s399 = scalar_select %p398, %s29, 1
          %s400 = smul.addr %s399, 32
          %s401 = smul.addr %s400, 4
          %s402 = scalar_lea.vmem %s0, %s401
        $region68: #{tpu_custom_call.1} parent=63 // pred_fallthru
          _
      $region64: #{tpu_custom_call.1} parent=5 // pred_fallthru
        _
      %p403 = scmp.le.s32.totalorder 1, %s22
      %p404 = scmp.lt.s32.totalorder %s22, 9
      %p405 = pnand %p403, %p404
      %p406 = pneg %p405
      // Predicated region
      $region69: #{tpu_custom_call.1} parent=5 // pred_check
        _
      $region70: #{tpu_custom_call.1} parent=5 // pred_check_branch
        %408 = sbr.rel (%p405) target = $region72
      $region71: #{tpu_custom_call.1} parent=5 // pred_region
        %s409 = ssub.s32 %s22, 1
        %p410 = scmp.lt.s32.totalorder %s31, 1
        %s411 = scalar_select %p410, %s31, 1
        %s412 = smul.addr %s411, 32
        %s413 = smul.addr %s412, 4
        %s414 = scalar_lea.vmem %s0, %s413
        %p415 = pneg %p60
        %p416 = pneg %p57
        %p417 = pneg %p81
        %p418 = pneg %p78
        %p419 = pneg %p102
        %p420 = pneg %p99
        %p421 = pneg %p123
        %p422 = pneg %p120
        %p423 = pneg %p144
        %p424 = pneg %p141
        %p425 = pneg %p165
        %p426 = pneg %p162
        %p427 = pneg %p186
        %p428 = pneg %p183
        %p429 = pneg %p207
        %p430 = pneg %p204
        %p431 = pneg %p228
        %p432 = pneg %p225
        %p433 = pneg %p249
        %p434 = pneg %p246
        %p435 = pneg %p270
        %p436 = pneg %p267
        %p437 = pneg %p291
        %p438 = pneg %p288
        %p439 = pneg %p312
        %p440 = pneg %p309
        %p441 = pneg %p340
        %p442 = pneg %p337
        %s443 = sand.u32 %s327, 1
        %s444 = scalar_lea.sflag [#allocation5], %s443
        %s445 = sand.u32 %s327, 1
        %s446 = smul.addr %s445, 32
        %s447 = scalar_lea.vmem [#allocation4], %s446
        %p448 = scmp.lt.s32.totalorder %s31, 1
        %s449 = scalar_select %p448, %s31, 1
        %s450 = smul.addr %s449, 32
        %s451 = smul.addr %s450, 4
        %s452 = scalar_lea.vmem %s0, %s451
        %s453 = smul.u32 4, %s32
        %s455 = smul.u32 %s32, 4
        %s456 = ssub.s32 %s455, 1
        %vm457 = vcmask 24576
        %vm458 = vsmask.f32 256
        %vm459 = vmand %vm457, %vm458
        %v460 = vld [vmem:[#allocation2] sm:$0x1]
        %v461 = vsel %vm459, 0, %v460
        %462 = vst [vmem:[#allocation2] sm:$0x1] %v461
        %v463 = vld [vmem:[#allocation2 + $0xc] sm:$0x1]
        %v464 = vsel %vm459, 0, %v463
        %465 = vst [vmem:[#allocation2 + $0xc] sm:$0x1] %v464
        %v466 = vld [vmem:[#allocation2 + $0x18] sm:$0x1]
        %v467 = vsel %vm459, 0, %v466
        %468 = vst [vmem:[#allocation2 + $0x18] sm:$0x1] %v467
        %v469 = vld [vmem:[#allocation2 + $0x24] sm:$0x1]
        %v470 = vsel %vm459, 0, %v469
        %471 = vst [vmem:[#allocation2 + $0x24] sm:$0x1] %v470
        %v472 = vld [vmem:[#allocation2 + $0x30] sm:$0x1]
        %v473 = vsel %vm459, 0, %v472
        %474 = vst [vmem:[#allocation2 + $0x30] sm:$0x1] %v473
        %v475 = vld [vmem:[#allocation2 + $0x3c] sm:$0x1]
        %v476 = vsel %vm459, 0, %v475
        %477 = vst [vmem:[#allocation2 + $0x3c] sm:$0x1] %v476
        %vm478 = vsmask.f32 7938
        %vm479 = vmand %vm457, %vm478
        %v480 = vld [vmem:[#allocation2 + $0x8] sm:$0x1]
        %v481 = vsel %vm479, 0, %v480
        %482 = vst [vmem:[#allocation2 + $0x8] sm:$0x1] %v481
        %v483 = vld [vmem:[#allocation2 + $0x14] sm:$0x1]
        %v484 = vsel %vm479, 0, %v483
        %485 = vst [vmem:[#allocation2 + $0x14] sm:$0x1] %v484
        %v486 = vld [vmem:[#allocation2 + $0x20] sm:$0x1]
        %v487 = vsel %vm479, 0, %v486
        %488 = vst [vmem:[#allocation2 + $0x20] sm:$0x1] %v487
        %v489 = vld [vmem:[#allocation2 + $0x2c] sm:$0x1]
        %v490 = vsel %vm479, 0, %v489
        %491 = vst [vmem:[#allocation2 + $0x2c] sm:$0x1] %v490
        %v492 = vld [vmem:[#allocation2 + $0x38] sm:$0x1]
        %v493 = vsel %vm479, 0, %v492
        %494 = vst [vmem:[#allocation2 + $0x38] sm:$0x1] %v493
        %v495 = vld [vmem:[#allocation2 + $0x44] sm:$0x1]
        %v496 = vsel %vm479, 0, %v495
        %497 = vst [vmem:[#allocation2 + $0x44] sm:$0x1] %v496
        %s498 = smul.u32 %s455, 2
        %s499 = smul.addr %s498, 4
        %s500 = scalar_lea.vmem %s452, %s499
        %v501 = vld [vmem:[%s500] sm:$0xf]
        %v502 = vld [vmem:[%s500 + $0x4] sm:$0xf]
        %v503 = vld [vmem:[%s500 + $0x8] sm:$0xf]
        %v504 = vld [vmem:[%s500 + $0xc] sm:$0xf]
        %v505 = vld [vmem:[%s500 + $0x10] sm:$0xf]
        %v506 = vld [vmem:[%s500 + $0x14] sm:$0xf]
        %v507 = vld [vmem:[%s500 + $0x18] sm:$0xf]
        %v508 = vld [vmem:[%s500 + $0x1c] sm:$0xf]
        %v509 = vld [vmem:[%s1] sm:$0x3]
        %v518 = vunpack.c.l.b16 %v501
        %v519 = vunpack.c.l.b16 %v502
        %v520 = vunpack.c.l.b16 %v503
        %v521 = vunpack.c.l.b16 %v504
        %v522 = vunpack.c.l.b16 %v505
        %v523 = vunpack.c.l.b16 %v506
        %v524 = vunpack.c.l.b16 %v507
        %v525 = vunpack.c.l.b16 %v508
        %v526 = vpack.c.b16 %v519, %v518
        %v527 = vpack.c.b16 %v521, %v520
        %v528 = vpack.c.b16 %v523, %v522
        %v529 = vpack.c.b16 %v525, %v524
        %vm530 = vcmask 31744
        %v532 = vsel %vm530, %v526, 0
        %v535 = vsel %vm530, %v527, 0
        %v538 = vsel %vm530, %v528, 0
        %v541 = vsel %vm530, %v529, 0
        %vm543 = vcmask 1041408
        %v545 = vsel %vm543, %v509, 0
        %547 = vmatpush.bf16.msra.mxu0 0
        %548 = vmatpush.bf16.msra.mxu0 0
        %549 = vmatpush.bf16.msra.mxu0 0
        %550 = vmatpush.bf16.msra.mxu0 0
        %551 = vmatpush.bf16.msra.mxu0 0
        %552 = vmatpush.bf16.msra.mxu0 0
        %553 = vmatpush.bf16.msra.mxu0 0
        %554 = vmatpush.bf16.msra.mxu0 %v545
        %555 = vmatmul.bf16.gmra.mxu0 %v532
        %v556 = vpop.f32.mrf.mxu0
        %v557 = vadd.f32 0.0, %v556
        %v558 = vpop.f32.mrf.mxu0
        %v559 = vadd.f32 0.0, %v558
        %560 = vmatmul.bf16.gmra.mxu0 %v535
        %v561 = vpop.f32.mrf.mxu0
        %v562 = vadd.f32 0.0, %v561
        %v563 = vpop.f32.mrf.mxu0
        %v564 = vadd.f32 0.0, %v563
        %565 = vmatmul.bf16.gmra.mxu0 %v538
        %v566 = vpop.f32.mrf.mxu0
        %v567 = vadd.f32 0.0, %v566
        %v568 = vpop.f32.mrf.mxu0
        %v569 = vadd.f32 0.0, %v568
        %570 = vmatmul.bf16.gmra.mxu0 %v541
        %v571 = vpop.f32.mrf.mxu0
        %v572 = vadd.f32 0.0, %v571
        %v573 = vpop.f32.mrf.mxu0
        %v574 = vadd.f32 0.0, %v573
        %575 = vdwg.mxu0
        %v576 = vld [vmem:[%s2] sm:$0x1]
        %v578 = vperm.slane %v576, 0
        %v580 = vmul.f32 %v557, %v578
        %v581 = vmul.f32 %v559, %v578
        %v582 = vmul.f32 %v562, %v578
        %v583 = vmul.f32 %v564, %v578
        %v584 = vmul.f32 %v567, %v578
        %v585 = vmul.f32 %v569, %v578
        %v586 = vmul.f32 %v572, %v578
        %v587 = vmul.f32 %v574, %v578
        %v588 = vld [vmem:[%s3] sm:$0x1]
        %v590 = vperm.slane %v588, 0
        %v592 = vadd.f32 %v580, %v590
        %v593 = vadd.f32 %v581, %v590
        %v594 = vadd.f32 %v582, %v590
        %v595 = vadd.f32 %v583, %v590
        %v596 = vadd.f32 %v584, %v590
        %v597 = vadd.f32 %v585, %v590
        %v598 = vadd.f32 %v586, %v590
        %v599 = vadd.f32 %v587, %v590
        %v600 = vmax.f32 %v592, 0.0
        %v601 = vmax.f32 %v593, 0.0
        %v602 = vmax.f32 %v594, 0.0
        %v603 = vmax.f32 %v595, 0.0
        %v604 = vmax.f32 %v596, 0.0
        %v605 = vmax.f32 %v597, 0.0
        %v606 = vmax.f32 %v598, 0.0
        %v607 = vmax.f32 %v599, 0.0
        %v608 = vpack.c.bf16 %v600, %v600
        %v609 = vpack.c.bf16 %v601, %v601
        %v610 = vpack.c.bf16 %v602, %v602
        %v611 = vpack.c.bf16 %v603, %v603
        %v612 = vpack.c.bf16 %v604, %v604
        %v613 = vpack.c.bf16 %v605, %v605
        %v614 = vpack.c.bf16 %v606, %v606
        %v615 = vpack.c.bf16 %v607, %v607
        %vm616 = vsmask.f32 4368
        %vm617 = vmor %vm458, %vm616
        %v619 = vshrl.u32 %v608, 16
        %v621 = vrot.slane %v619, 7
        %v622 = vshll.u32 %v608, 16
        %v624 = vor.u32 %v621, %v622
        %v625 = vrot.slane %v621, 4
        %v627 = vshrl.u32 %v609, 16
        %v629 = vrot.slane %v627, 7
        %v630 = vshll.u32 %v609, 16
        %v632 = vor.u32 %v629, %v630
        %v633 = vsel %vm617, %v625, %v632
        %v634 = vrot.slane %v629, 4
        %v636 = vshrl.u32 %v610, 16
        %v638 = vrot.slane %v636, 7
        %v639 = vshll.u32 %v610, 16
        %v641 = vor.u32 %v638, %v639
        %v642 = vrot.slane %v638, 4
        %v644 = vshrl.u32 %v611, 16
        %v646 = vrot.slane %v644, 7
        %v647 = vshll.u32 %v611, 16
        %v649 = vor.u32 %v646, %v647
        %v650 = vsel %vm617, %v642, %v649
        %v651 = vrot.slane %v646, 4
        %v653 = vshrl.u32 %v612, 16
        %v655 = vrot.slane %v653, 7
        %v656 = vshll.u32 %v612, 16
        %v658 = vor.u32 %v655, %v656
        %v659 = vrot.slane %v655, 4
        %v661 = vshrl.u32 %v613, 16
        %v663 = vrot.slane %v661, 7
        %v664 = vshll.u32 %v613, 16
        %v666 = vor.u32 %v663, %v664
        %v667 = vsel %vm617, %v659, %v666
        %v668 = vrot.slane %v663, 4
        %v670 = vshrl.u32 %v614, 16
        %v672 = vrot.slane %v670, 7
        %v673 = vshll.u32 %v614, 16
        %v675 = vor.u32 %v672, %v673
        %v676 = vrot.slane %v672, 4
        %v678 = vshrl.u32 %v615, 16
        %v680 = vrot.slane %v678, 7
        %v681 = vshll.u32 %v615, 16
        %v683 = vor.u32 %v680, %v681
        %v684 = vsel %vm617, %v676, %v683
        %v685 = vrot.slane %v680, 4
        %s698 = scalar_lea.vmem [#allocation2], 12
        %vm699 = vcmask 27648
        %vm700 = vmand %vm699, %vm478
        %v701 = vld [vmem:[%s698] sm:$0xf]
        %v702 = vsel %vm700, %v624, %v701
        %703 = vst [vmem:[%s698] sm:$0xf] %v702
        %vm704 = vcmask 27648
        %705 = vst.msk [vmem:[%s698 + $0x4] sm:$0xf] %vm704, %v633
        %v706 = vld [vmem:[%s698 + $0x8] sm:$0x1]
        %v707 = vsel %vm459, %v634, %v706
        %708 = vst [vmem:[%s698 + $0x8] sm:$0x1] %v707
        %v709 = vld [vmem:[%s698 + $0xc] sm:$0xf]
        %v710 = vsel %vm700, %v641, %v709
        %711 = vst [vmem:[%s698 + $0xc] sm:$0xf] %v710
        %712 = vst.msk [vmem:[%s698 + $0x10] sm:$0xf] %vm704, %v650
        %v713 = vld [vmem:[%s698 + $0x14] sm:$0x1]
        %v714 = vsel %vm459, %v651, %v713
        %715 = vst [vmem:[%s698 + $0x14] sm:$0x1] %v714
        %v716 = vld [vmem:[%s698 + $0x18] sm:$0xf]
        %v717 = vsel %vm700, %v658, %v716
        %718 = vst [vmem:[%s698 + $0x18] sm:$0xf] %v717
        %719 = vst.msk [vmem:[%s698 + $0x1c] sm:$0xf] %vm704, %v667
        %v720 = vld [vmem:[%s698 + $0x20] sm:$0x1]
        %v721 = vsel %vm459, %v668, %v720
        %722 = vst [vmem:[%s698 + $0x20] sm:$0x1] %v721
        %v723 = vld [vmem:[%s698 + $0x24] sm:$0xf]
        %v724 = vsel %vm700, %v675, %v723
        %725 = vst [vmem:[%s698 + $0x24] sm:$0xf] %v724
        %726 = vst.msk [vmem:[%s698 + $0x28] sm:$0xf] %vm704, %v684
        %v727 = vld [vmem:[%s698 + $0x2c] sm:$0x1]
        %v728 = vsel %vm459, %v685, %v727
        %729 = vst [vmem:[%s698 + $0x2c] sm:$0x1] %v728
        %p730 = scmp.gt.s32.totalorder %s456, 0
        %s731 = scalar_select %p730, %s456, 0
        %s732 = smul.u32 %s731, 2
        %s733 = smul.addr %s732, 4
        %s734 = scalar_lea.vmem %s452, %s733
        %v735 = vld [vmem:[%s734] sm:$0xf]
        %v736 = vld [vmem:[%s734 + $0x4] sm:$0xf]
        %v737 = vld [vmem:[%s1] sm:$0x3]
        %v740 = vunpack.c.l.b16 %v735
        %v741 = vunpack.c.l.b16 %v736
        %v742 = vpack.c.b16 %v741, %v740
        %v744 = vsel %vm530, %v742, 0
        %v747 = vsel %vm543, %v737, 0
        %749 = vmatpush.bf16.msra.mxu0 0
        %750 = vmatpush.bf16.msra.mxu0 0
        %751 = vmatpush.bf16.msra.mxu0 0
        %752 = vmatpush.bf16.msra.mxu0 0
        %753 = vmatpush.bf16.msra.mxu0 0
        %754 = vmatpush.bf16.msra.mxu0 0
        %755 = vmatpush.bf16.msra.mxu0 0
        %756 = vmatpush.bf16.msra.mxu0 %v747
        %757 = vmatmul.bf16.gmra.mxu0 %v744
        %v758 = vpop.f32.mrf.mxu0
        %v759 = vadd.f32 0.0, %v758
        %v760 = vpop.f32.mrf.mxu0
        %v761 = vadd.f32 0.0, %v760
        %762 = vdwg.mxu0
        %v763 = vld [vmem:[%s2] sm:$0x1]
        %v765 = vperm.slane %v763, 0
        %v767 = vmul.f32 %v759, %v765
        %v768 = vmul.f32 %v761, %v765
        %v769 = vld [vmem:[%s3] sm:$0x1]
        %v771 = vperm.slane %v769, 0
        %v773 = vadd.f32 %v767, %v771
        %v774 = vadd.f32 %v768, %v771
        %v775 = vmax.f32 %v773, 0.0
        %v776 = vmax.f32 %v774, 0.0
        %v777 = vpack.c.bf16 %v775, %v775
        %v778 = vpack.c.bf16 %v776, %v776
        %v780 = vshrl.u32 %v777, 16
        %v782 = vrot.slane %v780, 7
        %v783 = vshll.u32 %v777, 16
        %v785 = vor.u32 %v782, %v783
        %v786 = vrot.slane %v782, 4
        %v788 = vshrl.u32 %v778, 16
        %v790 = vrot.slane %v788, 7
        %v791 = vshll.u32 %v778, 16
        %v793 = vor.u32 %v790, %v791
        %v794 = vsel %vm617, %v786, %v793
        %v795 = vrot.slane %v790, 4
        %v799 = vld [vmem:[#allocation2] sm:$0xf]
        %v800 = vsel %vm700, %v785, %v799
        %801 = vst [vmem:[#allocation2] sm:$0xf] %v800
        %802 = vst.msk [vmem:[#allocation2 + $0x4] sm:$0xf] %vm704, %v794
        %v803 = vld [vmem:[#allocation2 + $0x8] sm:$0x1]
        %v804 = vsel %vm459, %v795, %v803
        %805 = vst [vmem:[#allocation2 + $0x8] sm:$0x1] %v804
        %p806 = scmp.eq.s32.totalorder %s32, 0
        // Predicated region
        $region73: #{tpu_custom_call.1} parent=71 // pred_check
          %p807 = pneg %p806
        $region74: #{tpu_custom_call.1} parent=71 // pred_check_branch
          %809 = sbr.rel (%p807) target = $region76
        $region75: #{tpu_custom_call.1} parent=71 // pred_region
          %810 = vst.msk [vmem:[#allocation2] sm:$0xf] %vm704, 0
          %811 = vst.msk [vmem:[#allocation2 + $0x4] sm:$0xf] %vm704, 0
          %vm812 = vcmask 24576
          %813 = vst.msk [vmem:[#allocation2 + $0x8] sm:$0x1] %vm812, 0
        $region76: #{tpu_custom_call.1} parent=71 // pred_fallthru
          _
        %s814 = sadd.s32 %s455, 4
        %p815 = scmp.lt.s32.totalorder %s814, 15
        %s816 = scalar_select %p815, %s814, 15
        %s817 = smul.u32 %s816, 2
        %s818 = smul.addr %s817, 4
        %s819 = scalar_lea.vmem %s452, %s818
        %v820 = vld [vmem:[%s819] sm:$0xf]
        %v821 = vld [vmem:[%s819 + $0x4] sm:$0xf]
        %v822 = vld [vmem:[%s1] sm:$0x3]
        %v825 = vunpack.c.l.b16 %v820
        %v826 = vunpack.c.l.b16 %v821
        %v827 = vpack.c.b16 %v826, %v825
        %v829 = vsel %vm530, %v827, 0
        %v832 = vsel %vm543, %v822, 0
        %834 = vmatpush.bf16.msra.mxu0 0
        %835 = vmatpush.bf16.msra.mxu0 0
        %836 = vmatpush.bf16.msra.mxu0 0
        %837 = vmatpush.bf16.msra.mxu0 0
        %838 = vmatpush.bf16.msra.mxu0 0
        %839 = vmatpush.bf16.msra.mxu0 0
        %840 = vmatpush.bf16.msra.mxu0 0
        %841 = vmatpush.bf16.msra.mxu0 %v832
        %842 = vmatmul.bf16.gmra.mxu0 %v829
        %v843 = vpop.f32.mrf.mxu0
        %v844 = vadd.f32 0.0, %v843
        %v845 = vpop.f32.mrf.mxu0
        %v846 = vadd.f32 0.0, %v845
        %847 = vdwg.mxu0
        %v848 = vld [vmem:[%s2] sm:$0x1]
        %v850 = vperm.slane %v848, 0
        %v852 = vmul.f32 %v844, %v850
        %v853 = vmul.f32 %v846, %v850
        %v854 = vld [vmem:[%s3] sm:$0x1]
        %v856 = vperm.slane %v854, 0
        %v858 = vadd.f32 %v852, %v856
        %v859 = vadd.f32 %v853, %v856
        %v860 = vmax.f32 %v858, 0.0
        %v861 = vmax.f32 %v859, 0.0
        %v862 = vpack.c.bf16 %v860, %v860
        %v863 = vpack.c.bf16 %v861, %v861
        %v865 = vshrl.u32 %v862, 16
        %v867 = vrot.slane %v865, 7
        %v868 = vshll.u32 %v862, 16
        %v870 = vor.u32 %v867, %v868
        %v871 = vrot.slane %v867, 4
        %v873 = vshrl.u32 %v863, 16
        %v875 = vrot.slane %v873, 7
        %v876 = vshll.u32 %v863, 16
        %v878 = vor.u32 %v875, %v876
        %v879 = vsel %vm617, %v871, %v878
        %v880 = vrot.slane %v875, 4
        %s884 = scalar_lea.vmem [#allocation2], 60
        %v885 = vld [vmem:[%s884] sm:$0xf]
        %v886 = vsel %vm700, %v870, %v885
        %887 = vst [vmem:[%s884] sm:$0xf] %v886
        %888 = vst.msk [vmem:[%s884 + $0x4] sm:$0xf] %vm704, %v879
        %v889 = vld [vmem:[%s884 + $0x8] sm:$0x1]
        %v890 = vsel %vm459, %v880, %v889
        %891 = vst [vmem:[%s884 + $0x8] sm:$0x1] %v890
        %p892 = scmp.ge.s32.totalorder %s814, 16
        // Predicated region
        $region77: #{tpu_custom_call.1} parent=71 // pred_check
          %p893 = pneg %p892
        $region78: #{tpu_custom_call.1} parent=71 // pred_check_branch
          %895 = sbr.rel (%p893) target = $region80
        $region79: #{tpu_custom_call.1} parent=71 // pred_region
          %896 = vst.msk [vmem:[%s884] sm:$0xf] %vm704, 0
          %897 = vst.msk [vmem:[%s884 + $0x4] sm:$0xf] %vm704, 0
          %vm898 = vcmask 24576
          %899 = vst.msk [vmem:[%s884 + $0x8] sm:$0x1] %vm898, 0
        $region80: #{tpu_custom_call.1} parent=71 // pred_fallthru
          _
        %v900 = vld [vmem:[#allocation2] sm:$0xf]
        %v901 = vld [vmem:[#allocation2 + $0x4] sm:$0xf]
        %v902 = vld [vmem:[#allocation2 + $0xc] sm:$0xf]
        %v903 = vld [vmem:[#allocation2 + $0x10] sm:$0xf]
        %v904 = vld [vmem:[#allocation2 + $0x18] sm:$0xf]
        %v905 = vld [vmem:[#allocation2 + $0x1c] sm:$0xf]
        %v906 = vld [vmem:[#allocation2 + $0x24] sm:$0xf]
        %v907 = vld [vmem:[#allocation2 + $0x28] sm:$0xf]
        %908 = vst.msk [vmem:[#allocation3] sm:$0xf] %vm704, %v900
        %909 = vst.msk [vmem:[#allocation3 + $0x4] sm:$0xf] %vm704, %v901
        %910 = vst.msk [vmem:[#allocation3 + $0x8] sm:$0xf] %vm704, %v902
        %911 = vst.msk [vmem:[#allocation3 + $0xc] sm:$0xf] %vm704, %v903
        %912 = vst.msk [vmem:[#allocation3 + $0x10] sm:$0xf] %vm704, %v904
        %913 = vst.msk [vmem:[#allocation3 + $0x14] sm:$0xf] %vm704, %v905
        %914 = vst.msk [vmem:[#allocation3 + $0x18] sm:$0xf] %vm704, %v906
        %915 = vst.msk [vmem:[#allocation3 + $0x1c] sm:$0xf] %vm704, %v907
        %v916 = vld [vmem:[#allocation2] sm:$0xf]
        %v917 = vld [vmem:[#allocation2 + $0x4] sm:$0xf]
        %v918 = vld [vmem:[#allocation2 + $0x8] sm:$0x1]
        %v919 = vld [vmem:[#allocation2 + $0xc] sm:$0xf]
        %v920 = vld [vmem:[#allocation2 + $0x10] sm:$0xf]
        %v921 = vld [vmem:[#allocation2 + $0x14] sm:$0x1]
        %v922 = vld [vmem:[#allocation2 + $0x18] sm:$0xf]
        %v923 = vld [vmem:[#allocation2 + $0x1c] sm:$0xf]
        %v924 = vld [vmem:[#allocation2 + $0x20] sm:$0x1]
        %v925 = vld [vmem:[#allocation2 + $0x24] sm:$0xf]
        %v926 = vld [vmem:[#allocation2 + $0x28] sm:$0xf]
        %v927 = vld [vmem:[#allocation2 + $0x2c] sm:$0x1]
        %vm928 = vsmask.f32 3328
        %vm929 = vsmask.f32 7440
        %vm930 = vmor %vm928, %vm929
        %v932 = vshrl.u32 %v916, 16
        %v934 = vrot.slane %v932, 4
        %v935 = vshll.u32 %v916, 16
        %v937 = vrot.slane %v935, 5
        %v938 = vor.u32 %v934, %v937
        %v939 = vrot.slane %v938, 4
        %v941 = vshll.u32 %v917, 16
        %v943 = vrot.slane %v941, 5
        %v944 = vsel %vm930, %v939, %v943
        %v945 = vshrl.u32 %v917, 16
        %v947 = vrot.slane %v945, 4
        %v948 = vor.u32 %v947, %v943
        %v949 = vrot.slane %v948, 4
        %v951 = vshll.u32 %v918, 16
        %v953 = vrot.slane %v951, 5
        %v954 = vsel %vm930, %v949, %v953
        %v956 = vshrl.u32 %v919, 16
        %v958 = vrot.slane %v956, 4
        %v959 = vshll.u32 %v919, 16
        %v961 = vrot.slane %v959, 5
        %v962 = vor.u32 %v958, %v961
        %v963 = vrot.slane %v962, 4
        %v965 = vshll.u32 %v920, 16
        %v967 = vrot.slane %v965, 5
        %v968 = vsel %vm930, %v963, %v967
        %v969 = vshrl.u32 %v920, 16
        %v971 = vrot.slane %v969, 4
        %v972 = vor.u32 %v971, %v967
        %v973 = vrot.slane %v972, 4
        %v975 = vshll.u32 %v921, 16
        %v977 = vrot.slane %v975, 5
        %v978 = vsel %vm930, %v973, %v977
        %v980 = vshrl.u32 %v922, 16
        %v982 = vrot.slane %v980, 4
        %v983 = vshll.u32 %v922, 16
        %v985 = vrot.slane %v983, 5
        %v986 = vor.u32 %v982, %v985
        %v987 = vrot.slane %v986, 4
        %v989 = vshll.u32 %v923, 16
        %v991 = vrot.slane %v989, 5
        %v992 = vsel %vm930, %v987, %v991
        %v993 = vshrl.u32 %v923, 16
        %v995 = vrot.slane %v993, 4
        %v996 = vor.u32 %v995, %v991
        %v997 = vrot.slane %v996, 4
        %v999 = vshll.u32 %v924, 16
        %v1001 = vrot.slane %v999, 5
        %v1002 = vsel %vm930, %v997, %v1001
        %v1004 = vshrl.u32 %v925, 16
        %v1006 = vrot.slane %v1004, 4
        %v1007 = vshll.u32 %v925, 16
        %v1009 = vrot.slane %v1007, 5
        %v1010 = vor.u32 %v1006, %v1009
        %v1011 = vrot.slane %v1010, 4
        %v1013 = vshll.u32 %v926, 16
        %v1015 = vrot.slane %v1013, 5
        %v1016 = vsel %vm930, %v1011, %v1015
        %v1017 = vshrl.u32 %v926, 16
        %v1019 = vrot.slane %v1017, 4
        %v1020 = vor.u32 %v1019, %v1015
        %v1021 = vrot.slane %v1020, 4
        %v1023 = vshll.u32 %v927, 16
        %v1025 = vrot.slane %v1023, 5
        %v1026 = vsel %vm930, %v1021, %v1025
        %1027 = vrot.lane.b32.xlu0 %v944, 4
        %v1028 = vpop.permute.xlu0 %1027
        %1029 = vrot.lane.b32.xlu0 %v954, 4
        %v1030 = vpop.permute.xlu0 %1029
        %1031 = vrot.lane.b32.xlu0 %v968, 4
        %v1032 = vpop.permute.xlu0 %1031
        %1033 = vrot.lane.b32.xlu0 %v978, 4
        %v1034 = vpop.permute.xlu0 %1033
        %1035 = vrot.lane.b32.xlu0 %v992, 4
        %v1036 = vpop.permute.xlu0 %1035
        %1037 = vrot.lane.b32.xlu0 %v1002, 4
        %v1038 = vpop.permute.xlu0 %1037
        %1039 = vrot.lane.b32.xlu0 %v1016, 4
        %v1040 = vpop.permute.xlu0 %1039
        %1041 = vrot.lane.b32.xlu0 %v1026, 4
        %v1042 = vpop.permute.xlu0 %1041
        %vm1051 = vcmask 60448
        %1052 = vst.msk [vmem:[#allocation3] sm:$0xf] %vm1051, %v1028
        %1053 = vst.msk [vmem:[#allocation3 + $0x4] sm:$0xf] %vm1051, %v1030
        %1054 = vst.msk [vmem:[#allocation3 + $0x8] sm:$0xf] %vm1051, %v1032
        %1055 = vst.msk [vmem:[#allocation3 + $0xc] sm:$0xf] %vm1051, %v1034
        %1056 = vst.msk [vmem:[#allocation3 + $0x10] sm:$0xf] %vm1051, %v1036
        %1057 = vst.msk [vmem:[#allocation3 + $0x14] sm:$0xf] %vm1051, %v1038
        %1058 = vst.msk [vmem:[#allocation3 + $0x18] sm:$0xf] %vm1051, %v1040
        %1059 = vst.msk [vmem:[#allocation3 + $0x1c] sm:$0xf] %vm1051, %v1042
        %v1060 = vld [vmem:[#allocation2] sm:$0xe]
        %v1061 = vld [vmem:[#allocation2 + $0x4] sm:$0xf]
        %v1062 = vld [vmem:[#allocation2 + $0x8] sm:$0x1]
        %v1063 = vld [vmem:[#allocation2 + $0xc] sm:$0xe]
        %v1064 = vld [vmem:[#allocation2 + $0x10] sm:$0xf]
        %v1065 = vld [vmem:[#allocation2 + $0x14] sm:$0x1]
        %v1066 = vld [vmem:[#allocation2 + $0x18] sm:$0xe]
        %v1067 = vld [vmem:[#allocation2 + $0x1c] sm:$0xf]
        %v1068 = vld [vmem:[#allocation2 + $0x20] sm:$0x1]
        %v1069 = vld [vmem:[#allocation2 + $0x24] sm:$0xe]
        %v1070 = vld [vmem:[#allocation2 + $0x28] sm:$0xf]
        %v1071 = vld [vmem:[#allocation2 + $0x2c] sm:$0x1]
        %vm1084 = vcmask 1042432
        %vm1085 = vcmask 1046532
        %vm1086 = vmor %vm1084, %vm1085
        %v1087 = vrot.slane %v1060, 5
        %v1088 = vrot.slane %v1087, 4
        %v1089 = vrot.slane %v1061, 5
        %v1090 = vsel %vm1086, %v1088, %v1089
        %v1091 = vrot.slane %v1089, 4
        %v1092 = vrot.slane %v1062, 5
        %v1093 = vsel %vm1086, %v1091, %v1092
        %v1094 = vrot.slane %v1063, 5
        %v1095 = vrot.slane %v1094, 4
        %v1096 = vrot.slane %v1064, 5
        %v1097 = vsel %vm1086, %v1095, %v1096
        %v1098 = vrot.slane %v1096, 4
        %v1099 = vrot.slane %v1065, 5
        %v1100 = vsel %vm1086, %v1098, %v1099
        %v1101 = vrot.slane %v1066, 5
        %v1102 = vrot.slane %v1101, 4
        %v1103 = vrot.slane %v1067, 5
        %v1104 = vsel %vm1086, %v1102, %v1103
        %v1105 = vrot.slane %v1103, 4
        %v1106 = vrot.slane %v1068, 5
        %v1107 = vsel %vm1086, %v1105, %v1106
        %v1108 = vrot.slane %v1069, 5
        %v1109 = vrot.slane %v1108, 4
        %v1110 = vrot.slane %v1070, 5
        %v1111 = vsel %vm1086, %v1109, %v1110
        %v1112 = vrot.slane %v1110, 4
        %v1113 = vrot.slane %v1071, 5
        %v1114 = vsel %vm1086, %v1112, %v1113
        %1115 = vrot.lane.b32.xlu0 %v1090, 8
        %v1116 = vpop.permute.xlu0 %1115
        %1117 = vrot.lane.b32.xlu0 %v1093, 8
        %v1118 = vpop.permute.xlu0 %1117
        %1119 = vrot.lane.b32.xlu0 %v1097, 8
        %v1120 = vpop.permute.xlu0 %1119
        %1121 = vrot.lane.b32.xlu0 %v1100, 8
        %v1122 = vpop.permute.xlu0 %1121
        %1123 = vrot.lane.b32.xlu0 %v1104, 8
        %v1124 = vpop.permute.xlu0 %1123
        %1125 = vrot.lane.b32.xlu0 %v1107, 8
        %v1126 = vpop.permute.xlu0 %1125
        %1127 = vrot.lane.b32.xlu0 %v1111, 8
        %v1128 = vpop.permute.xlu0 %1127
        %1129 = vrot.lane.b32.xlu0 %v1114, 8
        %v1130 = vpop.permute.xlu0 %1129
        %vm1139 = vcmask 93248
        %1140 = vst.msk [vmem:[#allocation3] sm:$0xf] %vm1139, %v1116
        %1141 = vst.msk [vmem:[#allocation3 + $0x4] sm:$0xf] %vm1139, %v1118
        %1142 = vst.msk [vmem:[#allocation3 + $0x8] sm:$0xf] %vm1139, %v1120
        %1143 = vst.msk [vmem:[#allocation3 + $0xc] sm:$0xf] %vm1139, %v1122
        %1144 = vst.msk [vmem:[#allocation3 + $0x10] sm:$0xf] %vm1139, %v1124
        %1145 = vst.msk [vmem:[#allocation3 + $0x14] sm:$0xf] %vm1139, %v1126
        %1146 = vst.msk [vmem:[#allocation3 + $0x18] sm:$0xf] %vm1139, %v1128
        %1147 = vst.msk [vmem:[#allocation3 + $0x1c] sm:$0xf] %vm1139, %v1130
        %v1148 = vld [vmem:[%s698] sm:$0xf]
        %v1149 = vld [vmem:[%s698 + $0x4] sm:$0xf]
        %v1150 = vld [vmem:[%s698 + $0xc] sm:$0xf]
        %v1151 = vld [vmem:[%s698 + $0x10] sm:$0xf]
        %v1152 = vld [vmem:[%s698 + $0x18] sm:$0xf]
        %v1153 = vld [vmem:[%s698 + $0x1c] sm:$0xf]
        %v1154 = vld [vmem:[%s698 + $0x24] sm:$0xf]
        %v1155 = vld [vmem:[%s698 + $0x28] sm:$0xf]
        %1164 = vrot.lane.b32.xlu0 %v1148, 12
        %v1165 = vpop.permute.xlu0 %1164
        %1166 = vrot.lane.b32.xlu0 %v1149, 12
        %v1167 = vpop.permute.xlu0 %1166
        %1168 = vrot.lane.b32.xlu0 %v1150, 12
        %v1169 = vpop.permute.xlu0 %1168
        %1170 = vrot.lane.b32.xlu0 %v1151, 12
        %v1171 = vpop.permute.xlu0 %1170
        %1172 = vrot.lane.b32.xlu0 %v1152, 12
        %v1173 = vpop.permute.xlu0 %1172
        %1174 = vrot.lane.b32.xlu0 %v1153, 12
        %v1175 = vpop.permute.xlu0 %1174
        %1176 = vrot.lane.b32.xlu0 %v1154, 12
        %v1177 = vpop.permute.xlu0 %1176
        %1178 = vrot.lane.b32.xlu0 %v1155, 12
        %v1179 = vpop.permute.xlu0 %1178
        %vm1188 = vcmask 126048
        %1189 = vst.msk [vmem:[#allocation3] sm:$0xf] %vm1188, %v1165
        %1190 = vst.msk [vmem:[#allocation3 + $0x4] sm:$0xf] %vm1188, %v1167
        %1191 = vst.msk [vmem:[#allocation3 + $0x8] sm:$0xf] %vm1188, %v1169
        %1192 = vst.msk [vmem:[#allocation3 + $0xc] sm:$0xf] %vm1188, %v1171
        %1193 = vst.msk [vmem:[#allocation3 + $0x10] sm:$0xf] %vm1188, %v1173
        %1194 = vst.msk [vmem:[#allocation3 + $0x14] sm:$0xf] %vm1188, %v1175
        %1195 = vst.msk [vmem:[#allocation3 + $0x18] sm:$0xf] %vm1188, %v1177
        %1196 = vst.msk [vmem:[#allocation3 + $0x1c] sm:$0xf] %vm1188, %v1179
        %v1197 = vld [vmem:[%s698] sm:$0xf]
        %v1198 = vld [vmem:[%s698 + $0x4] sm:$0xf]
        %v1199 = vld [vmem:[%s698 + $0x8] sm:$0x1]
        %v1200 = vld [vmem:[%s698 + $0xc] sm:$0xf]
        %v1201 = vld [vmem:[%s698 + $0x10] sm:$0xf]
        %v1202 = vld [vmem:[%s698 + $0x14] sm:$0x1]
        %v1203 = vld [vmem:[%s698 + $0x18] sm:$0xf]
        %v1204 = vld [vmem:[%s698 + $0x1c] sm:$0xf]
        %v1205 = vld [vmem:[%s698 + $0x20] sm:$0x1]
        %v1206 = vld [vmem:[%s698 + $0x24] sm:$0xf]
        %v1207 = vld [vmem:[%s698 + $0x28] sm:$0xf]
        %v1208 = vld [vmem:[%s698 + $0x2c] sm:$0x1]
        %v1210 = vshrl.u32 %v1197, 16
        %v1212 = vrot.slane %v1210, 4
        %v1213 = vshll.u32 %v1197, 16
        %v1215 = vrot.slane %v1213, 5
        %v1216 = vor.u32 %v1212, %v1215
        %v1217 = vrot.slane %v1216, 4
        %v1219 = vshll.u32 %v1198, 16
        %v1221 = vrot.slane %v1219, 5
        %v1222 = vsel %vm930, %v1217, %v1221
        %v1223 = vshrl.u32 %v1198, 16
        %v1225 = vrot.slane %v1223, 4
        %v1226 = vor.u32 %v1225, %v1221
        %v1227 = vrot.slane %v1226, 4
        %v1229 = vshll.u32 %v1199, 16
        %v1231 = vrot.slane %v1229, 5
        %v1232 = vsel %vm930, %v1227, %v1231
        %v1234 = vshrl.u32 %v1200, 16
        %v1236 = vrot.slane %v1234, 4
        %v1237 = vshll.u32 %v1200, 16
        %v1239 = vrot.slane %v1237, 5
        %v1240 = vor.u32 %v1236, %v1239
        %v1241 = vrot.slane %v1240, 4
        %v1243 = vshll.u32 %v1201, 16
        %v1245 = vrot.slane %v1243, 5
        %v1246 = vsel %vm930, %v1241, %v1245
        %v1247 = vshrl.u32 %v1201, 16
        %v1249 = vrot.slane %v1247, 4
        %v1250 = vor.u32 %v1249, %v1245
        %v1251 = vrot.slane %v1250, 4
        %v1253 = vshll.u32 %v1202, 16
        %v1255 = vrot.slane %v1253, 5
        %v1256 = vsel %vm930, %v1251, %v1255
        %v1258 = vshrl.u32 %v1203, 16
        %v1260 = vrot.slane %v1258, 4
        %v1261 = vshll.u32 %v1203, 16
        %v1263 = vrot.slane %v1261, 5
        %v1264 = vor.u32 %v1260, %v1263
        %v1265 = vrot.slane %v1264, 4
        %v1267 = vshll.u32 %v1204, 16
        %v1269 = vrot.slane %v1267, 5
        %v1270 = vsel %vm930, %v1265, %v1269
        %v1271 = vshrl.u32 %v1204, 16
        %v1273 = vrot.slane %v1271, 4
        %v1274 = vor.u32 %v1273, %v1269
        %v1275 = vrot.slane %v1274, 4
        %v1277 = vshll.u32 %v1205, 16
        %v1279 = vrot.slane %v1277, 5
        %v1280 = vsel %vm930, %v1275, %v1279
        %v1282 = vshrl.u32 %v1206, 16
        %v1284 = vrot.slane %v1282, 4
        %v1285 = vshll.u32 %v1206, 16
        %v1287 = vrot.slane %v1285, 5
        %v1288 = vor.u32 %v1284, %v1287
        %v1289 = vrot.slane %v1288, 4
        %v1291 = vshll.u32 %v1207, 16
        %v1293 = vrot.slane %v1291, 5
        %v1294 = vsel %vm930, %v1289, %v1293
        %v1295 = vshrl.u32 %v1207, 16
        %v1297 = vrot.slane %v1295, 4
        %v1298 = vor.u32 %v1297, %v1293
        %v1299 = vrot.slane %v1298, 4
        %v1301 = vshll.u32 %v1208, 16
        %v1303 = vrot.slane %v1301, 5
        %v1304 = vsel %vm930, %v1299, %v1303
        %1305 = vrot.lane.b32.xlu0 %v1222, 16
        %v1306 = vpop.permute.xlu0 %1305
        %1307 = vrot.lane.b32.xlu0 %v1232, 16
        %v1308 = vpop.permute.xlu0 %1307
        %1309 = vrot.lane.b32.xlu0 %v1246, 16
        %v1310 = vpop.permute.xlu0 %1309
        %1311 = vrot.lane.b32.xlu0 %v1256, 16
        %v1312 = vpop.permute.xlu0 %1311
        %1313 = vrot.lane.b32.xlu0 %v1270, 16
        %v1314 = vpop.permute.xlu0 %1313
        %1315 = vrot.lane.b32.xlu0 %v1280, 16
        %v1316 = vpop.permute.xlu0 %1315
        %1317 = vrot.lane.b32.xlu0 %v1294, 16
        %v1318 = vpop.permute.xlu0 %1317
        %1319 = vrot.lane.b32.xlu0 %v1304, 16
        %v1320 = vpop.permute.xlu0 %1319
        %vm1329 = vcmask 158848
        %1330 = vst.msk [vmem:[#allocation3] sm:$0xf] %vm1329, %v1306
        %1331 = vst.msk [vmem:[#allocation3 + $0x4] sm:$0xf] %vm1329, %v1308
        %1332 = vst.msk [vmem:[#allocation3 + $0x8] sm:$0xf] %vm1329, %v1310
        %1333 = vst.msk [vmem:[#allocation3 + $0xc] sm:$0xf] %vm1329, %v1312
        %1334 = vst.msk [vmem:[#allocation3 + $0x10] sm:$0xf] %vm1329, %v1314
        %1335 = vst.msk [vmem:[#allocation3 + $0x14] sm:$0xf] %vm1329, %v1316
        %1336 = vst.msk [vmem:[#allocation3 + $0x18] sm:$0xf] %vm1329, %v1318
        %1337 = vst.msk [vmem:[#allocation3 + $0x1c] sm:$0xf] %vm1329, %v1320
        %v1338 = vld [vmem:[%s698] sm:$0xe]
        %v1339 = vld [vmem:[%s698 + $0x4] sm:$0xf]
        %v1340 = vld [vmem:[%s698 + $0x8] sm:$0x1]
        %v1341 = vld [vmem:[%s698 + $0xc] sm:$0xe]
        %v1342 = vld [vmem:[%s698 + $0x10] sm:$0xf]
        %v1343 = vld [vmem:[%s698 + $0x14] sm:$0x1]
        %v1344 = vld [vmem:[%s698 + $0x18] sm:$0xe]
        %v1345 = vld [vmem:[%s698 + $0x1c] sm:$0xf]
        %v1346 = vld [vmem:[%s698 + $0x20] sm:$0x1]
        %v1347 = vld [vmem:[%s698 + $0x24] sm:$0xe]
        %v1348 = vld [vmem:[%s698 + $0x28] sm:$0xf]
        %v1349 = vld [vmem:[%s698 + $0x2c] sm:$0x1]
        %v1362 = vrot.slane %v1338, 5
        %v1363 = vrot.slane %v1362, 4
        %v1364 = vrot.slane %v1339, 5
        %v1365 = vsel %vm1086, %v1363, %v1364
        %v1366 = vrot.slane %v1364, 4
        %v1367 = vrot.slane %v1340, 5
        %v1368 = vsel %vm1086, %v1366, %v1367
        %v1369 = vrot.slane %v1341, 5
        %v1370 = vrot.slane %v1369, 4
        %v1371 = vrot.slane %v1342, 5
        %v1372 = vsel %vm1086, %v1370, %v1371
        %v1373 = vrot.slane %v1371, 4
        %v1374 = vrot.slane %v1343, 5
        %v1375 = vsel %vm1086, %v1373, %v1374
        %v1376 = vrot.slane %v1344, 5
        %v1377 = vrot.slane %v1376, 4
        %v1378 = vrot.slane %v1345, 5
        %v1379 = vsel %vm1086, %v1377, %v1378
        %v1380 = vrot.slane %v1378, 4
        %v1381 = vrot.slane %v1346, 5
        %v1382 = vsel %vm1086, %v1380, %v1381
        %v1383 = vrot.slane %v1347, 5
        %v1384 = vrot.slane %v1383, 4
        %v1385 = vrot.slane %v1348, 5
        %v1386 = vsel %vm1086, %v1384, %v1385
        %v1387 = vrot.slane %v1385, 4
        %v1388 = vrot.slane %v1349, 5
        %v1389 = vsel %vm1086, %v1387, %v1388
        %1390 = vrot.lane.b32.xlu0 %v1365, 20
        %v1391 = vpop.permute.xlu0 %1390
        %1392 = vrot.lane.b32.xlu0 %v1368, 20
        %v1393 = vpop.permute.xlu0 %1392
        %1394 = vrot.lane.b32.xlu0 %v1372, 20
        %v1395 = vpop.permute.xlu0 %1394
        %1396 = vrot.lane.b32.xlu0 %v1375, 20
        %v1397 = vpop.permute.xlu0 %1396
        %1398 = vrot.lane.b32.xlu0 %v1379, 20
        %v1399 = vpop.permute.xlu0 %1398
        %1400 = vrot.lane.b32.xlu0 %v1382, 20
        %v1401 = vpop.permute.xlu0 %1400
        %1402 = vrot.lane.b32.xlu0 %v1386, 20
        %v1403 = vpop.permute.xlu0 %1402
        %1404 = vrot.lane.b32.xlu0 %v1389, 20
        %v1405 = vpop.permute.xlu0 %1404
        %vm1414 = vcmask 191648
        %1415 = vst.msk [vmem:[#allocation3] sm:$0xf] %vm1414, %v1391
        %1416 = vst.msk [vmem:[#allocation3 + $0x4] sm:$0xf] %vm1414, %v1393
        %1417 = vst.msk [vmem:[#allocation3 + $0x8] sm:$0xf] %vm1414, %v1395
        %1418 = vst.msk [vmem:[#allocation3 + $0xc] sm:$0xf] %vm1414, %v1397
        %1419 = vst.msk [vmem:[#allocation3 + $0x10] sm:$0xf] %vm1414, %v1399
        %1420 = vst.msk [vmem:[#allocation3 + $0x14] sm:$0xf] %vm1414, %v1401
        %1421 = vst.msk [vmem:[#allocation3 + $0x18] sm:$0xf] %vm1414, %v1403
        %1422 = vst.msk [vmem:[#allocation3 + $0x1c] sm:$0xf] %vm1414, %v1405
        %s1423 = scalar_lea.vmem [#allocation2], 24
        %v1424 = vld [vmem:[%s1423] sm:$0xf]
        %v1425 = vld [vmem:[%s1423 + $0x4] sm:$0xf]
        %v1426 = vld [vmem:[%s1423 + $0xc] sm:$0xf]
        %v1427 = vld [vmem:[%s1423 + $0x10] sm:$0xf]
        %v1428 = vld [vmem:[%s1423 + $0x18] sm:$0xf]
        %v1429 = vld [vmem:[%s1423 + $0x1c] sm:$0xf]
        %v1430 = vld [vmem:[%s1423 + $0x24] sm:$0xf]
        %v1431 = vld [vmem:[%s1423 + $0x28] sm:$0xf]
        %1440 = vrot.lane.b32.xlu0 %v1424, 24
        %v1441 = vpop.permute.xlu0 %1440
        %1442 = vrot.lane.b32.xlu0 %v1425, 24
        %v1443 = vpop.permute.xlu0 %1442
        %1444 = vrot.lane.b32.xlu0 %v1426, 24
        %v1445 = vpop.permute.xlu0 %1444
        %1446 = vrot.lane.b32.xlu0 %v1427, 24
        %v1447 = vpop.permute.xlu0 %1446
        %1448 = vrot.lane.b32.xlu0 %v1428, 24
        %v1449 = vpop.permute.xlu0 %1448
        %1450 = vrot.lane.b32.xlu0 %v1429, 24
        %v1451 = vpop.permute.xlu0 %1450
        %1452 = vrot.lane.b32.xlu0 %v1430, 24
        %v1453 = vpop.permute.xlu0 %1452
        %1454 = vrot.lane.b32.xlu0 %v1431, 24
        %v1455 = vpop.permute.xlu0 %1454
        %vm1464 = vcmask 224448
        %1465 = vst.msk [vmem:[#allocation3] sm:$0xf] %vm1464, %v1441
        %1466 = vst.msk [vmem:[#allocation3 + $0x4] sm:$0xf] %vm1464, %v1443
        %1467 = vst.msk [vmem:[#allocation3 + $0x8] sm:$0xf] %vm1464, %v1445
        %1468 = vst.msk [vmem:[#allocation3 + $0xc] sm:$0xf] %vm1464, %v1447
        %1469 = vst.msk [vmem:[#allocation3 + $0x10] sm:$0xf] %vm1464, %v1449
        %1470 = vst.msk [vmem:[#allocation3 + $0x14] sm:$0xf] %vm1464, %v1451
        %1471 = vst.msk [vmem:[#allocation3 + $0x18] sm:$0xf] %vm1464, %v1453
        %1472 = vst.msk [vmem:[#allocation3 + $0x1c] sm:$0xf] %vm1464, %v1455
        %v1473 = vld [vmem:[%s1423] sm:$0xf]
        %v1474 = vld [vmem:[%s1423 + $0x4] sm:$0xf]
        %v1475 = vld [vmem:[%s1423 + $0x8] sm:$0x1]
        %v1476 = vld [vmem:[%s1423 + $0xc] sm:$0xf]
        %v1477 = vld [vmem:[%s1423 + $0x10] sm:$0xf]
        %v1478 = vld [vmem:[%s1423 + $0x14] sm:$0x1]
        %v1479 = vld [vmem:[%s1423 + $0x18] sm:$0xf]
        %v1480 = vld [vmem:[%s1423 + $0x1c] sm:$0xf]
        %v1481 = vld [vmem:[%s1423 + $0x20] sm:$0x1]
        %v1482 = vld [vmem:[%s1423 + $0x24] sm:$0xf]
        %v1483 = vld [vmem:[%s1423 + $0x28] sm:$0xf]
        %v1484 = vld [vmem:[%s1423 + $0x2c] sm:$0x1]
        %v1486 = vshrl.u32 %v1473, 16
        %v1488 = vrot.slane %v1486, 4
        %v1489 = vshll.u32 %v1473, 16
        %v1491 = vrot.slane %v1489, 5
        %v1492 = vor.u32 %v1488, %v1491
        %v1493 = vrot.slane %v1492, 4
        %v1495 = vshll.u32 %v1474, 16
        %v1497 = vrot.slane %v1495, 5
        %v1498 = vsel %vm930, %v1493, %v1497
        %v1499 = vshrl.u32 %v1474, 16
        %v1501 = vrot.slane %v1499, 4
        %v1502 = vor.u32 %v1501, %v1497
        %v1503 = vrot.slane %v1502, 4
        %v1505 = vshll.u32 %v1475, 16
        %v1507 = vrot.slane %v1505, 5
        %v1508 = vsel %vm930, %v1503, %v1507
        %v1510 = vshrl.u32 %v1476, 16
        %v1512 = vrot.slane %v1510, 4
        %v1513 = vshll.u32 %v1476, 16
        %v1515 = vrot.slane %v1513, 5
        %v1516 = vor.u32 %v1512, %v1515
        %v1517 = vrot.slane %v1516, 4
        %v1519 = vshll.u32 %v1477, 16
        %v1521 = vrot.slane %v1519, 5
        %v1522 = vsel %vm930, %v1517, %v1521
        %v1523 = vshrl.u32 %v1477, 16
        %v1525 = vrot.slane %v1523, 4
        %v1526 = vor.u32 %v1525, %v1521
        %v1527 = vrot.slane %v1526, 4
        %v1529 = vshll.u32 %v1478, 16
        %v1531 = vrot.slane %v1529, 5
        %v1532 = vsel %vm930, %v1527, %v1531
        %v1534 = vshrl.u32 %v1479, 16
        %v1536 = vrot.slane %v1534, 4
        %v1537 = vshll.u32 %v1479, 16
        %v1539 = vrot.slane %v1537, 5
        %v1540 = vor.u32 %v1536, %v1539
        %v1541 = vrot.slane %v1540, 4
        %v1543 = vshll.u32 %v1480, 16
        %v1545 = vrot.slane %v1543, 5
        %v1546 = vsel %vm930, %v1541, %v1545
        %v1547 = vshrl.u32 %v1480, 16
        %v1549 = vrot.slane %v1547, 4
        %v1550 = vor.u32 %v1549, %v1545
        %v1551 = vrot.slane %v1550, 4
        %v1553 = vshll.u32 %v1481, 16
        %v1555 = vrot.slane %v1553, 5
        %v1556 = vsel %vm930, %v1551, %v1555
        %v1558 = vshrl.u32 %v1482, 16
        %v1560 = vrot.slane %v1558, 4
        %v1561 = vshll.u32 %v1482, 16
        %v1563 = vrot.slane %v1561, 5
        %v1564 = vor.u32 %v1560, %v1563
        %v1565 = vrot.slane %v1564, 4
        %v1567 = vshll.u32 %v1483, 16
        %v1569 = vrot.slane %v1567, 5
        %v1570 = vsel %vm930, %v1565, %v1569
        %v1571 = vshrl.u32 %v1483, 16
        %v1573 = vrot.slane %v1571, 4
        %v1574 = vor.u32 %v1573, %v1569
        %v1575 = vrot.slane %v1574, 4
        %v1577 = vshll.u32 %v1484, 16
        %v1579 = vrot.slane %v1577, 5
        %v1580 = vsel %vm930, %v1575, %v1579
        %1581 = vrot.lane.b32.xlu0 %v1498, 28
        %v1582 = vpop.permute.xlu0 %1581
        %1583 = vrot.lane.b32.xlu0 %v1508, 28
        %v1584 = vpop.permute.xlu0 %1583
        %1585 = vrot.lane.b32.xlu0 %v1522, 28
        %v1586 = vpop.permute.xlu0 %1585
        %1587 = vrot.lane.b32.xlu0 %v1532, 28
        %v1588 = vpop.permute.xlu0 %1587
        %1589 = vrot.lane.b32.xlu0 %v1546, 28
        %v1590 = vpop.permute.xlu0 %1589
        %1591 = vrot.lane.b32.xlu0 %v1556, 28
        %v1592 = vpop.permute.xlu0 %1591
        %1593 = vrot.lane.b32.xlu0 %v1570, 28
        %v1594 = vpop.permute.xlu0 %1593
        %1595 = vrot.lane.b32.xlu0 %v1580, 28
        %v1596 = vpop.permute.xlu0 %1595
        %vm1605 = vcmask 257248
        %1606 = vst.msk [vmem:[#allocation3] sm:$0xf] %vm1605, %v1582
        %1607 = vst.msk [vmem:[#allocation3 + $0x4] sm:$0xf] %vm1605, %v1584
        %1608 = vst.msk [vmem:[#allocation3 + $0x8] sm:$0xf] %vm1605, %v1586
        %1609 = vst.msk [vmem:[#allocation3 + $0xc] sm:$0xf] %vm1605, %v1588
        %1610 = vst.msk [vmem:[#allocation3 + $0x10] sm:$0xf] %vm1605, %v1590
        %1611 = vst.msk [vmem:[#allocation3 + $0x14] sm:$0xf] %vm1605, %v1592
        %1612 = vst.msk [vmem:[#allocation3 + $0x18] sm:$0xf] %vm1605, %v1594
        %1613 = vst.msk [vmem:[#allocation3 + $0x1c] sm:$0xf] %vm1605, %v1596
        %v1614 = vld [vmem:[%s1423] sm:$0xe]
        %v1615 = vld [vmem:[%s1423 + $0x4] sm:$0xf]
        %v1616 = vld [vmem:[%s1423 + $0x8] sm:$0x1]
        %v1617 = vld [vmem:[%s1423 + $0xc] sm:$0xe]
        %v1618 = vld [vmem:[%s1423 + $0x10] sm:$0xf]
        %v1619 = vld [vmem:[%s1423 + $0x14] sm:$0x1]
        %v1620 = vld [vmem:[%s1423 + $0x18] sm:$0xe]
        %v1621 = vld [vmem:[%s1423 + $0x1c] sm:$0xf]
        %v1622 = vld [vmem:[%s1423 + $0x20] sm:$0x1]
        %v1623 = vld [vmem:[%s1423 + $0x24] sm:$0xe]
        %v1624 = vld [vmem:[%s1423 + $0x28] sm:$0xf]
        %v1625 = vld [vmem:[%s1423 + $0x2c] sm:$0x1]
        %v1638 = vrot.slane %v1614, 5
        %v1639 = vrot.slane %v1638, 4
        %v1640 = vrot.slane %v1615, 5
        %v1641 = vsel %vm1086, %v1639, %v1640
        %v1642 = vrot.slane %v1640, 4
        %v1643 = vrot.slane %v1616, 5
        %v1644 = vsel %vm1086, %v1642, %v1643
        %v1645 = vrot.slane %v1617, 5
        %v1646 = vrot.slane %v1645, 4
        %v1647 = vrot.slane %v1618, 5
        %v1648 = vsel %vm1086, %v1646, %v1647
        %v1649 = vrot.slane %v1647, 4
        %v1650 = vrot.slane %v1619, 5
        %v1651 = vsel %vm1086, %v1649, %v1650
        %v1652 = vrot.slane %v1620, 5
        %v1653 = vrot.slane %v1652, 4
        %v1654 = vrot.slane %v1621, 5
        %v1655 = vsel %vm1086, %v1653, %v1654
        %v1656 = vrot.slane %v1654, 4
        %v1657 = vrot.slane %v1622, 5
        %v1658 = vsel %vm1086, %v1656, %v1657
        %v1659 = vrot.slane %v1623, 5
        %v1660 = vrot.slane %v1659, 4
        %v1661 = vrot.slane %v1624, 5
        %v1662 = vsel %vm1086, %v1660, %v1661
        %v1663 = vrot.slane %v1661, 4
        %v1664 = vrot.slane %v1625, 5
        %v1665 = vsel %vm1086, %v1663, %v1664
        %1666 = vrot.lane.b32.xlu0 %v1641, 32
        %v1667 = vpop.permute.xlu0 %1666
        %1668 = vrot.lane.b32.xlu0 %v1644, 32
        %v1669 = vpop.permute.xlu0 %1668
        %1670 = vrot.lane.b32.xlu0 %v1648, 32
        %v1671 = vpop.permute.xlu0 %1670
        %1672 = vrot.lane.b32.xlu0 %v1651, 32
        %v1673 = vpop.permute.xlu0 %1672
        %1674 = vrot.lane.b32.xlu0 %v1655, 32
        %v1675 = vpop.permute.xlu0 %1674
        %1676 = vrot.lane.b32.xlu0 %v1658, 32
        %v1677 = vpop.permute.xlu0 %1676
        %1678 = vrot.lane.b32.xlu0 %v1662, 32
        %v1679 = vpop.permute.xlu0 %1678
        %1680 = vrot.lane.b32.xlu0 %v1665, 32
        %v1681 = vpop.permute.xlu0 %1680
        %vm1690 = vcmask 290048
        %1691 = vst.msk [vmem:[#allocation3] sm:$0xf] %vm1690, %v1667
        %1692 = vst.msk [vmem:[#allocation3 + $0x4] sm:$0xf] %vm1690, %v1669
        %1693 = vst.msk [vmem:[#allocation3 + $0x8] sm:$0xf] %vm1690, %v1671
        %1694 = vst.msk [vmem:[#allocation3 + $0xc] sm:$0xf] %vm1690, %v1673
        %1695 = vst.msk [vmem:[#allocation3 + $0x10] sm:$0xf] %vm1690, %v1675
        %1696 = vst.msk [vmem:[#allocation3 + $0x14] sm:$0xf] %vm1690, %v1677
        %1697 = vst.msk [vmem:[#allocation3 + $0x18] sm:$0xf] %vm1690, %v1679
        %1698 = vst.msk [vmem:[#allocation3 + $0x1c] sm:$0xf] %vm1690, %v1681
        %v1699 = vld [vmem:[#allocation3] sm:$0xf]
        %v1700 = vld [vmem:[#allocation3 + $0x4] sm:$0xf]
        %v1701 = vld [vmem:[#allocation3 + $0x8] sm:$0xf]
        %v1702 = vld [vmem:[#allocation3 + $0xc] sm:$0xf]
        %v1703 = vld [vmem:[#allocation3 + $0x10] sm:$0xf]
        %v1704 = vld [vmem:[#allocation3 + $0x14] sm:$0xf]
        %v1705 = vld [vmem:[#allocation3 + $0x18] sm:$0xf]
        %v1706 = vld [vmem:[#allocation3 + $0x1c] sm:$0xf]
        %v1707 = vld [vmem:[%s4] sm:$0xf]
        %v1708 = vld [vmem:[%s4 + $0x4] sm:$0xf]
        %v1709 = vld [vmem:[%s4 + $0x8] sm:$0xf]
        %v1710 = vld [vmem:[%s4 + $0xc] sm:$0xf]
        %v1711 = vld [vmem:[%s4 + $0x10] sm:$0x3]
        %v1720 = vunpack.c.l.b16 %v1699
        %v1721 = vunpack.c.l.b16 %v1700
        %v1722 = vunpack.c.l.b16 %v1701
        %v1723 = vunpack.c.l.b16 %v1702
        %v1724 = vunpack.c.l.b16 %v1703
        %v1725 = vunpack.c.l.b16 %v1704
        %v1726 = vunpack.c.l.b16 %v1705
        %v1727 = vunpack.c.l.b16 %v1706
        %v1728 = vpack.c.b16 %v1721, %v1720
        %v1729 = vpack.c.b16 %v1723, %v1722
        %v1730 = vpack.c.b16 %v1725, %v1724
        %v1731 = vpack.c.b16 %v1727, %v1726
        %v1737 = vunpack.c.l.b16 %v1707
        %v1738 = vunpack.c.l.b16 %v1708
        %v1739 = vunpack.c.l.b16 %v1709
        %v1740 = vunpack.c.l.b16 %v1710
        %v1741 = vunpack.c.l.b16 %v1711
        %v1742 = vpack.c.b16 %v1738, %v1737
        %v1743 = vpack.c.b16 %v1740, %v1739
        %v1744 = vpack.c.b16 %v1741, %v1741
        %vm1747 = vcmask 293888
        %v1749 = vsel %vm1747, %v1728, 0
        %v1752 = vsel %vm1747, %v1729, 0
        %v1755 = vsel %vm1747, %v1730, 0
        %v1758 = vsel %vm1747, %v1731, 0
        %v1761 = vsel %vm543, %v1744, 0
        %1763 = vmatpush.bf16.msra.mxu0 0
        %1764 = vmatpush.bf16.msra.mxu0 0
        %1765 = vmatpush.bf16.msra.mxu0 0
        %1766 = vmatpush.bf16.msra.mxu0 0
        %1767 = vmatpush.bf16.msra.mxu0 0
        %1768 = vmatpush.bf16.msra.mxu0 %v1761
        %1769 = vmatpush.bf16.msra.mxu0 %v1743
        %1770 = vmatpush.bf16.msra.mxu0 %v1742
        %1771 = vmatmul.bf16.gmra.mxu0 %v1749
        %v1772 = vpop.f32.mrf.mxu0
        %v1773 = vadd.f32 0.0, %v1772
        %v1774 = vpop.f32.mrf.mxu0
        %v1775 = vadd.f32 0.0, %v1774
        %1776 = vmatmul.bf16.gmra.mxu0 %v1752
        %v1777 = vpop.f32.mrf.mxu0
        %v1778 = vadd.f32 0.0, %v1777
        %v1779 = vpop.f32.mrf.mxu0
        %v1780 = vadd.f32 0.0, %v1779
        %1781 = vmatmul.bf16.gmra.mxu0 %v1755
        %v1782 = vpop.f32.mrf.mxu0
        %v1783 = vadd.f32 0.0, %v1782
        %v1784 = vpop.f32.mrf.mxu0
        %v1785 = vadd.f32 0.0, %v1784
        %1786 = vmatmul.bf16.gmra.mxu0 %v1758
        %v1787 = vpop.f32.mrf.mxu0
        %v1788 = vadd.f32 0.0, %v1787
        %v1789 = vpop.f32.mrf.mxu0
        %v1790 = vadd.f32 0.0, %v1789
        %1791 = vdwg.mxu0
        %v1792 = vld [vmem:[%s5] sm:$0x1]
        %v1794 = vperm.slane %v1792, 0
        %v1796 = vmul.f32 %v1773, %v1794
        %v1797 = vmul.f32 %v1775, %v1794
        %v1798 = vmul.f32 %v1778, %v1794
        %v1799 = vmul.f32 %v1780, %v1794
        %v1800 = vmul.f32 %v1783, %v1794
        %v1801 = vmul.f32 %v1785, %v1794
        %v1802 = vmul.f32 %v1788, %v1794
        %v1803 = vmul.f32 %v1790, %v1794
        %v1804 = vld [vmem:[%s6] sm:$0x1]
        %v1806 = vperm.slane %v1804, 0
        %v1808 = vadd.f32 %v1796, %v1806
        %v1809 = vadd.f32 %v1797, %v1806
        %v1810 = vadd.f32 %v1798, %v1806
        %v1811 = vadd.f32 %v1799, %v1806
        %v1812 = vadd.f32 %v1800, %v1806
        %v1813 = vadd.f32 %v1801, %v1806
        %v1814 = vadd.f32 %v1802, %v1806
        %v1815 = vadd.f32 %v1803, %v1806
        %v1816 = vmax.f32 %v1808, 0.0
        %v1817 = vmax.f32 %v1809, 0.0
        %v1818 = vmax.f32 %v1810, 0.0
        %v1819 = vmax.f32 %v1811, 0.0
        %v1820 = vmax.f32 %v1812, 0.0
        %v1821 = vmax.f32 %v1813, 0.0
        %v1822 = vmax.f32 %v1814, 0.0
        %v1823 = vmax.f32 %v1815, 0.0
        %v1824 = vpack.c.bf16 %v1817, %v1816
        %v1825 = vpack.c.bf16 %v1819, %v1818
        %v1826 = vpack.c.bf16 %v1821, %v1820
        %v1827 = vpack.c.bf16 %v1823, %v1822
        %v1828 = vld [vmem:[%s7] sm:$0x3]
        %v1830 = vsel %vm530, %v1824, 0
        %v1833 = vsel %vm530, %v1825, 0
        %v1836 = vsel %vm530, %v1826, 0
        %v1839 = vsel %vm530, %v1827, 0
        %v1842 = vsel %vm543, %v1828, 0
        %1844 = vmatpush.bf16.msra.mxu0 0
        %1845 = vmatpush.bf16.msra.mxu0 0
        %1846 = vmatpush.bf16.msra.mxu0 0
        %1847 = vmatpush.bf16.msra.mxu0 0
        %1848 = vmatpush.bf16.msra.mxu0 0
        %1849 = vmatpush.bf16.msra.mxu0 0
        %1850 = vmatpush.bf16.msra.mxu0 0
        %1851 = vmatpush.bf16.msra.mxu0 %v1842
        %1852 = vmatmul.bf16.gmra.mxu0 %v1830
        %v1853 = vpop.f32.mrf.mxu0
        %v1854 = vadd.f32 0.0, %v1853
        %v1855 = vpop.f32.mrf.mxu0
        %v1856 = vadd.f32 0.0, %v1855
        %1857 = vmatmul.bf16.gmra.mxu0 %v1833
        %v1858 = vpop.f32.mrf.mxu0
        %v1859 = vadd.f32 0.0, %v1858
        %v1860 = vpop.f32.mrf.mxu0
        %v1861 = vadd.f32 0.0, %v1860
        %1862 = vmatmul.bf16.gmra.mxu0 %v1836
        %v1863 = vpop.f32.mrf.mxu0
        %v1864 = vadd.f32 0.0, %v1863
        %v1865 = vpop.f32.mrf.mxu0
        %v1866 = vadd.f32 0.0, %v1865
        %1867 = vmatmul.bf16.gmra.mxu0 %v1839
        %v1868 = vpop.f32.mrf.mxu0
        %v1869 = vadd.f32 0.0, %v1868
        %v1870 = vpop.f32.mrf.mxu0
        %v1871 = vadd.f32 0.0, %v1870
        %1872 = vdwg.mxu0
        %v1873 = vld [vmem:[%s8] sm:$0x1]
        %v1875 = vperm.slane %v1873, 0
        %v1877 = vmul.f32 %v1854, %v1875
        %v1878 = vmul.f32 %v1856, %v1875
        %v1879 = vmul.f32 %v1859, %v1875
        %v1880 = vmul.f32 %v1861, %v1875
        %v1881 = vmul.f32 %v1864, %v1875
        %v1882 = vmul.f32 %v1866, %v1875
        %v1883 = vmul.f32 %v1869, %v1875
        %v1884 = vmul.f32 %v1871, %v1875
        %v1885 = vld [vmem:[%s9] sm:$0x1]
        %v1887 = vperm.slane %v1885, 0
        %v1889 = vadd.f32 %v1877, %v1887
        %v1890 = vadd.f32 %v1878, %v1887
        %v1891 = vadd.f32 %v1879, %v1887
        %v1892 = vadd.f32 %v1880, %v1887
        %v1893 = vadd.f32 %v1881, %v1887
        %v1894 = vadd.f32 %v1882, %v1887
        %v1895 = vadd.f32 %v1883, %v1887
        %v1896 = vadd.f32 %v1884, %v1887
        %v1897 = vld [vmem:[%s500] sm:$0xf]
        %v1898 = vld [vmem:[%s500 + $0x4] sm:$0xf]
        %v1899 = vld [vmem:[%s500 + $0x8] sm:$0xf]
        %v1900 = vld [vmem:[%s500 + $0xc] sm:$0xf]
        %v1901 = vld [vmem:[%s500 + $0x10] sm:$0xf]
        %v1902 = vld [vmem:[%s500 + $0x14] sm:$0xf]
        %v1903 = vld [vmem:[%s500 + $0x18] sm:$0xf]
        %v1904 = vld [vmem:[%s500 + $0x1c] sm:$0xf]
        %v1905 = vld [vmem:[%s10] sm:$0x3]
        %v1914 = vunpack.c.l.b16 %v1897
        %v1915 = vunpack.c.l.b16 %v1898
        %v1916 = vunpack.c.l.b16 %v1899
        %v1917 = vunpack.c.l.b16 %v1900
        %v1918 = vunpack.c.l.b16 %v1901
        %v1919 = vunpack.c.l.b16 %v1902
        %v1920 = vunpack.c.l.b16 %v1903
        %v1921 = vunpack.c.l.b16 %v1904
        %v1922 = vpack.c.b16 %v1915, %v1914
        %v1923 = vpack.c.b16 %v1917, %v1916
        %v1924 = vpack.c.b16 %v1919, %v1918
        %v1925 = vpack.c.b16 %v1921, %v1920
        %v1927 = vsel %vm530, %v1922, 0
        %v1930 = vsel %vm530, %v1923, 0
        %v1933 = vsel %vm530, %v1924, 0
        %v1936 = vsel %vm530, %v1925, 0
        %v1939 = vsel %vm543, %v1905, 0
        %1941 = vmatpush.bf16.msra.mxu0 0
        %1942 = vmatpush.bf16.msra.mxu0 0
        %1943 = vmatpush.bf16.msra.mxu0 0
        %1944 = vmatpush.bf16.msra.mxu0 0
        %1945 = vmatpush.bf16.msra.mxu0 0
        %1946 = vmatpush.bf16.msra.mxu0 0
        %1947 = vmatpush.bf16.msra.mxu0 0
        %1948 = vmatpush.bf16.msra.mxu0 %v1939
        %1949 = vmatmul.bf16.gmra.mxu0 %v1927
        %v1950 = vpop.f32.mrf.mxu0
        %v1951 = vadd.f32 0.0, %v1950
        %v1952 = vpop.f32.mrf.mxu0
        %v1953 = vadd.f32 0.0, %v1952
        %1954 = vmatmul.bf16.gmra.mxu0 %v1930
        %v1955 = vpop.f32.mrf.mxu0
        %v1956 = vadd.f32 0.0, %v1955
        %v1957 = vpop.f32.mrf.mxu0
        %v1958 = vadd.f32 0.0, %v1957
        %1959 = vmatmul.bf16.gmra.mxu0 %v1933
        %v1960 = vpop.f32.mrf.mxu0
        %v1961 = vadd.f32 0.0, %v1960
        %v1962 = vpop.f32.mrf.mxu0
        %v1963 = vadd.f32 0.0, %v1962
        %1964 = vmatmul.bf16.gmra.mxu0 %v1936
        %v1965 = vpop.f32.mrf.mxu0
        %v1966 = vadd.f32 0.0, %v1965
        %v1967 = vpop.f32.mrf.mxu0
        %v1968 = vadd.f32 0.0, %v1967
        %1969 = vdwg.mxu0
        %v1970 = vld [vmem:[%s11] sm:$0x1]
        %v1972 = vperm.slane %v1970, 0
        %v1974 = vmul.f32 %v1951, %v1972
        %v1975 = vmul.f32 %v1953, %v1972
        %v1976 = vmul.f32 %v1956, %v1972
        %v1977 = vmul.f32 %v1958, %v1972
        %v1978 = vmul.f32 %v1961, %v1972
        %v1979 = vmul.f32 %v1963, %v1972
        %v1980 = vmul.f32 %v1966, %v1972
        %v1981 = vmul.f32 %v1968, %v1972
        %v1982 = vld [vmem:[%s12] sm:$0x1]
        %v1984 = vperm.slane %v1982, 0
        %v1986 = vadd.f32 %v1974, %v1984
        %v1987 = vadd.f32 %v1975, %v1984
        %v1988 = vadd.f32 %v1976, %v1984
        %v1989 = vadd.f32 %v1977, %v1984
        %v1990 = vadd.f32 %v1978, %v1984
        %v1991 = vadd.f32 %v1979, %v1984
        %v1992 = vadd.f32 %v1980, %v1984
        %v1993 = vadd.f32 %v1981, %v1984
        %v1994 = vadd.f32 %v1889, %v1986
        %v1995 = vadd.f32 %v1890, %v1987
        %v1996 = vadd.f32 %v1891, %v1988
        %v1997 = vadd.f32 %v1892, %v1989
        %v1998 = vadd.f32 %v1893, %v1990
        %v1999 = vadd.f32 %v1894, %v1991
        %v2000 = vadd.f32 %v1895, %v1992
        %v2001 = vadd.f32 %v1896, %v1993
        %v2002 = vmax.f32 %v1994, 0.0
        %v2003 = vmax.f32 %v1995, 0.0
        %v2004 = vmax.f32 %v1996, 0.0
        %v2005 = vmax.f32 %v1997, 0.0
        %v2006 = vmax.f32 %v1998, 0.0
        %v2007 = vmax.f32 %v1999, 0.0
        %v2008 = vmax.f32 %v2000, 0.0
        %v2009 = vmax.f32 %v2001, 0.0
        %v2010 = vpack.c.bf16 %v2002, %v2002
        %v2011 = vpack.c.bf16 %v2003, %v2003
        %v2012 = vpack.c.bf16 %v2004, %v2004
        %v2013 = vpack.c.bf16 %v2005, %v2005
        %v2014 = vpack.c.bf16 %v2006, %v2006
        %v2015 = vpack.c.bf16 %v2007, %v2007
        %v2016 = vpack.c.bf16 %v2008, %v2008
        %v2017 = vpack.c.bf16 %v2009, %v2009
        %vm2018 = vcmask 125952
        %2019 = vst.msk [vmem:[%s447] sm:$0xf] %vm2018, %v2010
        %2020 = vst.msk [vmem:[%s447 + $0x4] sm:$0xf] %vm2018, %v2011
        %2021 = vst.msk [vmem:[%s447 + $0x8] sm:$0xf] %vm2018, %v2012
        %2022 = vst.msk [vmem:[%s447 + $0xc] sm:$0xf] %vm2018, %v2013
        %2023 = vst.msk [vmem:[%s447 + $0x10] sm:$0xf] %vm2018, %v2014
        %2024 = vst.msk [vmem:[%s447 + $0x14] sm:$0xf] %vm2018, %v2015
        %2025 = vst.msk [vmem:[%s447 + $0x18] sm:$0xf] %vm2018, %v2016
        %2026 = vst.msk [vmem:[%s447 + $0x1c] sm:$0xf] %vm2018, %v2017
        %s2027 = sand.u32 %s327, 1
        %s2028 = scalar_lea.sflag [#allocation5], %s2027
        %s2029 = sand.u32 %s327, 1
        %s2030 = smul.addr %s2029, 32
        %s2031 = scalar_lea.vmem [#allocation4], %s2030
        // Predicated region
        $region81: #{tpu_custom_call.1} parent=71 // pred_check
          %p2032 = pneg %p337
        $region82: #{tpu_custom_call.1} parent=71 // pred_check_branch
          %2034 = sbr.rel (%p2032) target = $region84
        $region83: #{tpu_custom_call.1} parent=71 // pred_region
          %s2035 = smul.u32 4, %s32
          %2037 = vsyncadd %s2028, 0
          %s2038 = smul.addr %s2035, 2
          %s2039 = smul.addr %s31, 32
          %s2040 = sadd.s32 %s2038, %s2039
          %s2041 = smul.addr %s2040, 4
          %s2042 = scalar_lea.hbm %s13, %s2041
          %s2043 = sshll.u32 %s2031, 4
          %s2044 = int_to_ptr.vmem [resolvable:$true] %s2043
          %s2045 = sshll.u32 %s2042, 4
          %s2046 = int_to_ptr.hbm [resolvable:$true] %s2045
          %2051 = dma.vmem_to_hbm [thread:$0]  %s2044, 512, %s2046, %s2028, 64, 64, 4
        $region84: #{tpu_custom_call.1} parent=71 // pred_fallthru
          _
      $region72: #{tpu_custom_call.1} parent=5 // pred_fallthru
        _
      %p2052 = scmp.le.s32.totalorder 2, %s22
      // Predicated region
      $region85: #{tpu_custom_call.1} parent=5 // pred_check
        %p2053 = pneg %p2052
      $region86: #{tpu_custom_call.1} parent=5 // pred_check_branch
        %2055 = sbr.rel (%p2053) target = $region88
      $region87: #{tpu_custom_call.1} parent=5 // pred_region
        %s2056 = ssub.s32 %s22, 2
        // Predicated region
        $region89: #{tpu_custom_call.1} parent=87 // pred_check
          %p2057 = pneg %p343
        $region90: #{tpu_custom_call.1} parent=87 // pred_check_branch
          %2059 = sbr.rel (%p2057) target = $region92
        $region91: #{tpu_custom_call.1} parent=87 // pred_region
          %s2060 = sand.u32 %s328, 1
          %s2061 = scalar_lea.sflag [#allocation5], %s2060
          %s2062 = sand.u32 %s328, 1
          %s2063 = smul.addr %s2062, 32
          %s2064 = scalar_lea.vmem [#allocation4], %s2063
          %2066 = dma.done %s2061, 512
        $region92: #{tpu_custom_call.1} parent=87 // pred_fallthru
          _
      $region88: #{tpu_custom_call.1} parent=5 // pred_fallthru
        _
    $region6: #{tpu_custom_call.1} parent=1 // loop_footer
      %s26 = sadd.s32 1, %s22
    $region7: #{tpu_custom_call.1} parent=1 // loop_footer_branch
      %21 = sbr.rel target = $region3
    $region8: #{tpu_custom_call.1} parent=1 // loop_exit
      _
    %2067 = vsyncpa [#allocation5], 1
    %s2068 = scalar_lea.sflag [#allocation5], 1
    %2069 = vsyncpa %s2068, 1

</llo_original>
